<compile_context>
chip_gen: v7x
topology: tpu7x:2x2x1
jax: 0.10.0
libtpu: 0.0.40
codegen_flags: <defaults>
</compile_context>

<pallas_src>
import functools

import jax
import jax.numpy as jnp
from jax.experimental import pallas as pl
from jax.experimental.pallas import tpu as pltpu

Z_DIM = 64
# channel sizes of the CausalConv1D stack, then the final Linear
CHANNELS = [6, 1024, 512, 256, 128, Z_DIM]   # conv layers: 6->1024->512->256->128->64
C_IN_PAD = 8        # pad 6 input channels to 8 (zero rows in W1) for sublane alignment
C_OUT_PAD = 128     # pad final Linear 64 -> 128 output columns for lane-dense stores
MAX_TM = 1024       # largest batch tile (fits comfortably under a 32 MiB VMEM budget)


def _leaky_relu(v):
    # torch.nn.LeakyReLU(0.1)
    return jnp.where(v > 0, v, 0.1 * v)


def _round_up(n, m):
    return ((n + m - 1) // m) * m


def wrench_encoder_kernel(
    x_ref,
    w1_ref, b1_ref,
    w2_ref, b2_ref,
    w3_ref, b3_ref,
    w4_ref, b4_ref,
    w5_ref, b5_ref,
    wl_ref, bl_ref,
    o_ref,
):
    def layer(h_bf16, w_ref, b_ref, act):
        # bf16 operands into the MXU, f32 accumulation; bias/activation in f32 (VPU).
        y = jnp.dot(h_bf16, w_ref[...],
                    preferred_element_type=jnp.float32) + b_ref[...]
        if act:
            # Keep the inter-layer activation in bf16: halves VMEM spill traffic for
            # the (TM, 1024)/(TM, 512) intermediates; same rounding point as casting
            # at the next dot.
            return _leaky_relu(y).astype(jnp.bfloat16)
        return y

    h = x_ref[...].astype(jnp.bfloat16)                # (TM, 8)
    # 5 x (CausalConv1D[k=2, L=1] == matmul with the k=1 tap) + LeakyReLU(0.1)
    h = layer(h, w1_ref, b1_ref, True)
    h = layer(h, w2_ref, b2_ref, True)
    h = layer(h, w3_ref, b3_ref, True)
    h = layer(h, w4_ref, b4_ref, True)
    h = layer(h, w5_ref, b5_ref, True)
    # Flatten is a no-op for (B, 64, 1); final Linear(z_dim, z_dim) zero-padded to
    # 128 output columns (lane-dense store), no activation.
    h = layer(h, wl_ref, bl_ref, False)                # (TM, 128) f32
    o_ref[...] = h.astype(o_ref.dtype)


@jax.jit
def wrench_encoder_forward(x, params):
    """x: (B, 6, 1) float32 (PyTorch NCW).  Returns (B, z_dim, 1) float32."""
    B = x.shape[0]
    assert x.shape[1] == 6 and x.shape[2] == 1, "Flatten+Linear(z_dim,z_dim) requires L==1"

    # (B, 6) -> (B, 8) with zero-padded channels (W1's extra rows are zero).
    x2d = jnp.pad(x[:, :, 0], ((0, 0), (0, C_IN_PAD - 6)))

    # Batch tile: multiple of 8 sublanes, up to MAX_TM rows per grid step.
    TM = min(MAX_TM, _round_up(B, 8))
    Bp = _round_up(B, TM)
    if Bp != B:
        x2d = jnp.pad(x2d, ((0, Bp - B), (0, 0)))
    nb = pl.cdiv(Bp, TM)

    x_spec = pl.BlockSpec((TM, C_IN_PAD), lambda i: (i, 0))
    out_spec = pl.BlockSpec((TM, C_OUT_PAD), lambda i: (i, 0))
    # Constant index_map -> weights/biases DMA'd once and kept resident in VMEM.
    resident = lambda a: pl.BlockSpec(a.shape, lambda i: (0, 0))
    in_specs = [x_spec] + [resident(p) for p in params]

    out2d = pl.pallas_call(
        wrench_encoder_kernel,
        out_shape=jax.ShapeDtypeStruct((Bp, C_OUT_PAD), jnp.float32),
        grid=(nb,),
        in_specs=in_specs,
        out_specs=out_spec,
        compiler_params=pltpu.CompilerParams(
            dimension_semantics=("parallel",),    # batch tiles shard across v7x's 2 TCs
            vmem_limit_bytes=32 * 1024 * 1024,    # headroom for TM=1024 on v5e's 16MiB default
        ),
    )(x2d, *params)

    # Drop padded batch rows and padded output columns; unsqueeze(2) -> (B, 64, 1).
    return out2d[:B, :Z_DIM, None]


def make_params(key):
    """Deterministic synthetic parameters matching the PyTorch module's shapes.

    Conv weights are created in PyTorch layout (C_out, C_in, K=2) and reduced to the
    k=1 tap (C_in, C_out), the only tap that contributes when L == 1.  Returns:
      kernel_params : bf16 weights (input-padded 6->8, output-padded 64->128 on the
                      final Linear) + f32 biases, interleaved [w1,b1,...,wl,bl].
      f32_params    : unpadded f32 (w, b) pairs for the exact reference.
    """
    kernel_params = []
    f32_params = []
    for i in range(len(CHANNELS) - 1):
        c_in, c_out = CHANNELS[i], CHANNELS[i + 1]
        key, kw, kb = jax.random.split(key, 3)
        w_conv = jax.random.normal(kw, (c_out, c_in, 2), jnp.float32) * 0.05   # PyTorch conv shape
        b_conv = jax.random.normal(kb, (c_out,), jnp.float32) * 0.05
        w = jnp.transpose(w_conv[:, :, 1])                                     # (c_in, c_out), k=1 tap
        f32_params.append((w, b_conv))
        if i == 0:
            w = jnp.pad(w, ((0, C_IN_PAD - c_in), (0, 0)))                     # 6 -> 8 zero rows
        kernel_params.append(w.astype(jnp.bfloat16))
        kernel_params.append(b_conv[None, :])                                  # (1, c_out) f32

    key, kw, kb = jax.random.split(key, 3)
    w_lin = jax.random.normal(kw, (Z_DIM, Z_DIM), jnp.float32) * 0.05          # PyTorch Linear (out, in)
    b_lin = jax.random.normal(kb, (Z_DIM,), jnp.float32) * 0.05
    wl = jnp.transpose(w_lin)                                                  # (64, 64)
    f32_params.append((wl, b_lin))
    # Zero-pad to 128 output columns so the kernel's HBM writeback is lane-dense.
    kernel_params.append(jnp.pad(wl, ((0, 0), (0, C_OUT_PAD - Z_DIM))).astype(jnp.bfloat16))
    kernel_params.append(jnp.pad(b_lin, (0, C_OUT_PAD - Z_DIM))[None, :])      # (1, 128) f32
    return kernel_params, f32_params


def reference_forward_bf16(x, kernel_params):
    """Pure-JAX reference of the exact kernel math (bf16 weights/operands, f32 accum)."""
    h = jnp.pad(x[:, :, 0], ((0, 0), (0, C_IN_PAD - 6))).astype(jnp.float32)
    ws = kernel_params[0::2]
    bs = kernel_params[1::2]
    for i in range(6):
        y = jnp.dot(h.astype(jnp.bfloat16), ws[i],
                    preferred_element_type=jnp.float32) + bs[i]
        h = _leaky_relu(y) if i < 5 else y
    return h[:, :Z_DIM, None]


def reference_forward_f32(x, f32_params):
    """Full-precision reference of the original PyTorch math (f32 end to end)."""
    h = x[:, :, 0].astype(jnp.float32)
    for i, (w, b) in enumerate(f32_params):
        y = jnp.dot(h, w) + b
        h = _leaky_relu(y) if i < 5 else y
    return h[:, :, None]


if __name__ == "__main__":
    key = jax.random.PRNGKey(0)
    key, kx = jax.random.split(key)

    B = 2
    x = jax.random.normal(kx, (B, 6, 1), jnp.float32)   # wrench_vector: (batch, 6, length=1)

    kernel_params, f32_params = make_params(key)

    out = wrench_encoder_forward(x, kernel_params)
    out = jax.block_until_ready(out)
    assert out.shape == (B, Z_DIM, 1), out.shape

    # Tight check against the bf16-matched reference (same rounding points as kernel).
    ref_bf16 = reference_forward_bf16(x, kernel_params)
    assert jnp.allclose(out, ref_bf16, atol=2e-3, rtol=2e-3), \
        float(jnp.max(jnp.abs(out - ref_bf16)))

    # Sanity check against the exact f32 reference (bounds the compounded bf16 error).
    ref_f32 = reference_forward_f32(x, f32_params)
    scale = float(jnp.max(jnp.abs(ref_f32))) + 1e-6
    rel_err = float(jnp.max(jnp.abs(out - ref_f32))) / scale
    assert rel_err < 5e-2, rel_err

    print("KERNEL_OK")
</pallas_src>

<mosaic_0001>
module attributes {stable_mosaic.version = 11 : i64} {
  func.func @wrench_encoder_kernel(%arg0: i32, %arg1: memref<8x8xf32, #tpu.memory_space<vmem>>, %arg2: memref<8x1024xbf16, #tpu.memory_space<vmem>>, %arg3: memref<1x1024xf32, #tpu.memory_space<vmem>>, %arg4: memref<1024x512xbf16, #tpu.memory_space<vmem>>, %arg5: memref<1x512xf32, #tpu.memory_space<vmem>>, %arg6: memref<512x256xbf16, #tpu.memory_space<vmem>>, %arg7: memref<1x256xf32, #tpu.memory_space<vmem>>, %arg8: memref<256x128xbf16, #tpu.memory_space<vmem>>, %arg9: memref<1x128xf32, #tpu.memory_space<vmem>>, %arg10: memref<128x64xbf16, #tpu.memory_space<vmem>>, %arg11: memref<1x64xf32, #tpu.memory_space<vmem>>, %arg12: memref<64x128xbf16, #tpu.memory_space<vmem>>, %arg13: memref<1x128xf32, #tpu.memory_space<vmem>>, %arg14: memref<8x128xf32, #tpu.memory_space<vmem>>) attributes {dimension_semantics = [#tpu.dimension_semantics<parallel>], iteration_bounds = array<i64: 1>, scalar_prefetch = 0 : i64, scratch_operands = 0 : i64, tpu.core_type = #tpu.core_type<tc>, window_params = [{transform_indices = @transform_0, window_bounds = array<i64: 8, 8>}, {pipeline_mode = #tpu.pipeline_mode<synchronous>, transform_indices = @transform_1, window_bounds = array<i64: 8, 1024>}, {pipeline_mode = #tpu.pipeline_mode<synchronous>, transform_indices = @transform_2, window_bounds = array<i64: 1, 1024>}, {pipeline_mode = #tpu.pipeline_mode<synchronous>, transform_indices = @transform_3, window_bounds = array<i64: 1024, 512>}, {pipeline_mode = #tpu.pipeline_mode<synchronous>, transform_indices = @transform_4, window_bounds = array<i64: 1, 512>}, {pipeline_mode = #tpu.pipeline_mode<synchronous>, transform_indices = @transform_5, window_bounds = array<i64: 512, 256>}, {pipeline_mode = #tpu.pipeline_mode<synchronous>, transform_indices = @transform_6, window_bounds = array<i64: 1, 256>}, {pipeline_mode = #tpu.pipeline_mode<synchronous>, transform_indices = @transform_7, window_bounds = array<i64: 256, 128>}, {pipeline_mode = #tpu.pipeline_mode<synchronous>, transform_indices = @transform_8, window_bounds = array<i64: 1, 128>}, {pipeline_mode = #tpu.pipeline_mode<synchronous>, transform_indices = @transform_9, window_bounds = array<i64: 128, 64>}, {pipeline_mode = #tpu.pipeline_mode<synchronous>, transform_indices = @transform_10, window_bounds = array<i64: 1, 64>}, {pipeline_mode = #tpu.pipeline_mode<synchronous>, transform_indices = @transform_11, window_bounds = array<i64: 64, 128>}, {pipeline_mode = #tpu.pipeline_mode<synchronous>, transform_indices = @transform_12, window_bounds = array<i64: 1, 128>}, {transform_indices = @transform_13, window_bounds = array<i64: 8, 128>}]} {
    %c0 = arith.constant 0 : index
    %c0_0 = arith.constant 0 : index
    %0 = vector.load %arg1[%c0, %c0_0] : memref<8x8xf32, #tpu.memory_space<vmem>>, vector<8x8xf32>
    %1 = arith.truncf %0 : vector<8x8xf32> to vector<8x8xbf16>
    %c0_1 = arith.constant 0 : index
    %c0_2 = arith.constant 0 : index
    %2 = vector.load %arg2[%c0_1, %c0_2] : memref<8x1024xbf16, #tpu.memory_space<vmem>>, vector<8x1024xbf16>
    %cst = arith.constant dense<0.000000e+00> : vector<8x1024xf32>
    %3 = tpu.matmul %1, %2, %cst {dimension_numbers = #tpu.dot_dimension_numbers<[1], [0], [0], [1], [0, 0, 1, 1], [], []>} : vector<8x8xbf16>, vector<8x1024xbf16>, vector<8x1024xf32> -> vector<8x1024xf32>
    %c0_3 = arith.constant 0 : index
    %c0_4 = arith.constant 0 : index
    %4 = vector.load %arg3[%c0_3, %c0_4] : memref<1x1024xf32, #tpu.memory_space<vmem>>, vector<1x1024xf32>
    %5 = vector.broadcast %4 : vector<1x1024xf32> to vector<8x1024xf32>
    %6 = arith.addf %3, %5 : vector<8x1024xf32>
    %cst_5 = arith.constant 0.000000e+00 : f32
    %7 = vector.broadcast %cst_5 : f32 to vector<8x1024xf32>
    %8 = arith.cmpf ogt, %6, %7 : vector<8x1024xf32>
    %cst_6 = arith.constant 1.000000e-01 : f32
    %9 = vector.broadcast %cst_6 : f32 to vector<8x1024xf32>
    %10 = arith.mulf %9, %6 : vector<8x1024xf32>
    %11 = arith.select %8, %6, %10 : vector<8x1024xi1>, vector<8x1024xf32>
    %12 = arith.truncf %11 : vector<8x1024xf32> to vector<8x1024xbf16>
    %c0_7 = arith.constant 0 : index
    %c0_8 = arith.constant 0 : index
    %13 = vector.load %arg4[%c0_7, %c0_8] : memref<1024x512xbf16, #tpu.memory_space<vmem>>, vector<1024x512xbf16>
    %cst_9 = arith.constant dense<0.000000e+00> : vector<8x512xf32>
    %14 = tpu.matmul %12, %13, %cst_9 {dimension_numbers = #tpu.dot_dimension_numbers<[1], [0], [0], [1], [0, 0, 1, 1], [], []>} : vector<8x1024xbf16>, vector<1024x512xbf16>, vector<8x512xf32> -> vector<8x512xf32>
    %c0_10 = arith.constant 0 : index
    %c0_11 = arith.constant 0 : index
    %15 = vector.load %arg5[%c0_10, %c0_11] : memref<1x512xf32, #tpu.memory_space<vmem>>, vector<1x512xf32>
    %16 = vector.broadcast %15 : vector<1x512xf32> to vector<8x512xf32>
    %17 = arith.addf %14, %16 : vector<8x512xf32>
    %cst_12 = arith.constant 0.000000e+00 : f32
    %18 = vector.broadcast %cst_12 : f32 to vector<8x512xf32>
    %19 = arith.cmpf ogt, %17, %18 : vector<8x512xf32>
    %cst_13 = arith.constant 1.000000e-01 : f32
    %20 = vector.broadcast %cst_13 : f32 to vector<8x512xf32>
    %21 = arith.mulf %20, %17 : vector<8x512xf32>
    %22 = arith.select %19, %17, %21 : vector<8x512xi1>, vector<8x512xf32>
    %23 = arith.truncf %22 : vector<8x512xf32> to vector<8x512xbf16>
    %c0_14 = arith.constant 0 : index
    %c0_15 = arith.constant 0 : index
    %24 = vector.load %arg6[%c0_14, %c0_15] : memref<512x256xbf16, #tpu.memory_space<vmem>>, vector<512x256xbf16>
    %cst_16 = arith.constant dense<0.000000e+00> : vector<8x256xf32>
    %25 = tpu.matmul %23, %24, %cst_16 {dimension_numbers = #tpu.dot_dimension_numbers<[1], [0], [0], [1], [0, 0, 1, 1], [], []>} : vector<8x512xbf16>, vector<512x256xbf16>, vector<8x256xf32> -> vector<8x256xf32>
    %c0_17 = arith.constant 0 : index
    %c0_18 = arith.constant 0 : index
    %26 = vector.load %arg7[%c0_17, %c0_18] : memref<1x256xf32, #tpu.memory_space<vmem>>, vector<1x256xf32>
    %27 = vector.broadcast %26 : vector<1x256xf32> to vector<8x256xf32>
    %28 = arith.addf %25, %27 : vector<8x256xf32>
    %cst_19 = arith.constant 0.000000e+00 : f32
    %29 = vector.broadcast %cst_19 : f32 to vector<8x256xf32>
    %30 = arith.cmpf ogt, %28, %29 : vector<8x256xf32>
    %cst_20 = arith.constant 1.000000e-01 : f32
    %31 = vector.broadcast %cst_20 : f32 to vector<8x256xf32>
    %32 = arith.mulf %31, %28 : vector<8x256xf32>
    %33 = arith.select %30, %28, %32 : vector<8x256xi1>, vector<8x256xf32>
    %34 = arith.truncf %33 : vector<8x256xf32> to vector<8x256xbf16>
    %c0_21 = arith.constant 0 : index
    %c0_22 = arith.constant 0 : index
    %35 = vector.load %arg8[%c0_21, %c0_22] : memref<256x128xbf16, #tpu.memory_space<vmem>>, vector<256x128xbf16>
    %cst_23 = arith.constant dense<0.000000e+00> : vector<8x128xf32>
    %36 = tpu.matmul %34, %35, %cst_23 {dimension_numbers = #tpu.dot_dimension_numbers<[1], [0], [0], [1], [0, 0, 1, 1], [], []>} : vector<8x256xbf16>, vector<256x128xbf16>, vector<8x128xf32> -> vector<8x128xf32>
    %c0_24 = arith.constant 0 : index
    %c0_25 = arith.constant 0 : index
    %37 = vector.load %arg9[%c0_24, %c0_25] : memref<1x128xf32, #tpu.memory_space<vmem>>, vector<1x128xf32>
    %38 = vector.broadcast %37 : vector<1x128xf32> to vector<8x128xf32>
    %39 = arith.addf %36, %38 : vector<8x128xf32>
    %cst_26 = arith.constant 0.000000e+00 : f32
    %40 = vector.broadcast %cst_26 : f32 to vector<8x128xf32>
    %41 = arith.cmpf ogt, %39, %40 : vector<8x128xf32>
    %cst_27 = arith.constant 1.000000e-01 : f32
    %42 = vector.broadcast %cst_27 : f32 to vector<8x128xf32>
    %43 = arith.mulf %42, %39 : vector<8x128xf32>
    %44 = arith.select %41, %39, %43 : vector<8x128xi1>, vector<8x128xf32>
    %45 = arith.truncf %44 : vector<8x128xf32> to vector<8x128xbf16>
    %c0_28 = arith.constant 0 : index
    %c0_29 = arith.constant 0 : index
    %46 = vector.load %arg10[%c0_28, %c0_29] : memref<128x64xbf16, #tpu.memory_space<vmem>>, vector<128x64xbf16>
    %cst_30 = arith.constant dense<0.000000e+00> : vector<8x64xf32>
    %47 = tpu.matmul %45, %46, %cst_30 {dimension_numbers = #tpu.dot_dimension_numbers<[1], [0], [0], [1], [0, 0, 1, 1], [], []>} : vector<8x128xbf16>, vector<128x64xbf16>, vector<8x64xf32> -> vector<8x64xf32>
    %c0_31 = arith.constant 0 : index
    %c0_32 = arith.constant 0 : index
    %48 = vector.load %arg11[%c0_31, %c0_32] : memref<1x64xf32, #tpu.memory_space<vmem>>, vector<1x64xf32>
    %49 = vector.broadcast %48 : vector<1x64xf32> to vector<8x64xf32>
    %50 = arith.addf %47, %49 : vector<8x64xf32>
    %cst_33 = arith.constant 0.000000e+00 : f32
    %51 = vector.broadcast %cst_33 : f32 to vector<8x64xf32>
    %52 = arith.cmpf ogt, %50, %51 : vector<8x64xf32>
    %cst_34 = arith.constant 1.000000e-01 : f32
    %53 = vector.broadcast %cst_34 : f32 to vector<8x64xf32>
    %54 = arith.mulf %53, %50 : vector<8x64xf32>
    %55 = arith.select %52, %50, %54 : vector<8x64xi1>, vector<8x64xf32>
    %56 = arith.truncf %55 : vector<8x64xf32> to vector<8x64xbf16>
    %c0_35 = arith.constant 0 : index
    %c0_36 = arith.constant 0 : index
    %57 = vector.load %arg12[%c0_35, %c0_36] : memref<64x128xbf16, #tpu.memory_space<vmem>>, vector<64x128xbf16>
    %cst_37 = arith.constant dense<0.000000e+00> : vector<8x128xf32>
    %58 = tpu.matmul %56, %57, %cst_37 {dimension_numbers = #tpu.dot_dimension_numbers<[1], [0], [0], [1], [0, 0, 1, 1], [], []>} : vector<8x64xbf16>, vector<64x128xbf16>, vector<8x128xf32> -> vector<8x128xf32>
    %c0_38 = arith.constant 0 : index
    %c0_39 = arith.constant 0 : index
    %59 = vector.load %arg13[%c0_38, %c0_39] : memref<1x128xf32, #tpu.memory_space<vmem>>, vector<1x128xf32>
    %60 = vector.broadcast %59 : vector<1x128xf32> to vector<8x128xf32>
    %61 = arith.addf %58, %60 : vector<8x128xf32>
    %c0_40 = arith.constant 0 : index
    %c0_41 = arith.constant 0 : index
    %62 = vector.load %arg14[%c0_40, %c0_41] : memref<8x128xf32, #tpu.memory_space<vmem>>, vector<8x128xf32>
    tpu.vector_store %arg14[%c0_40, %c0_41], %61 {strides = array<i32>} : memref<8x128xf32, #tpu.memory_space<vmem>>, vector<8x128xf32>,
    return
  }
  func.func @transform_0(%arg0: i32) -> (i32, i32) {
    %c0_i32 = arith.constant 0 : i32
    %c0_i32_0 = arith.constant 0 : i32
    return %arg0, %c0_i32 : i32, i32
  }
  func.func @transform_1(%arg0: i32) -> (i32, i32) {
    %c0_i32 = arith.constant 0 : i32
    %c0_i32_0 = arith.constant 0 : i32
    %c0_i32_1 = arith.constant 0 : i32
    return %c0_i32, %c0_i32_0 : i32, i32
  }
  func.func @transform_2(%arg0: i32) -> (i32, i32) {
    %c0_i32 = arith.constant 0 : i32
    %c0_i32_0 = arith.constant 0 : i32
    %c0_i32_1 = arith.constant 0 : i32
    return %c0_i32, %c0_i32_0 : i32, i32
  }
  func.func @transform_3(%arg0: i32) -> (i32, i32) {
    %c0_i32 = arith.constant 0 : i32
    %c0_i32_0 = arith.constant 0 : i32
    %c0_i32_1 = arith.constant 0 : i32
    return %c0_i32, %c0_i32_0 : i32, i32
  }
  func.func @transform_4(%arg0: i32) -> (i32, i32) {
    %c0_i32 = arith.constant 0 : i32
    %c0_i32_0 = arith.constant 0 : i32
    %c0_i32_1 = arith.constant 0 : i32
    return %c0_i32, %c0_i32_0 : i32, i32
  }
  func.func @transform_5(%arg0: i32) -> (i32, i32) {
    %c0_i32 = arith.constant 0 : i32
    %c0_i32_0 = arith.constant 0 : i32
    %c0_i32_1 = arith.constant 0 : i32
    return %c0_i32, %c0_i32_0 : i32, i32
  }
  func.func @transform_6(%arg0: i32) -> (i32, i32) {
    %c0_i32 = arith.constant 0 : i32
    %c0_i32_0 = arith.constant 0 : i32
    %c0_i32_1 = arith.constant 0 : i32
    return %c0_i32, %c0_i32_0 : i32, i32
  }
  func.func @transform_7(%arg0: i32) -> (i32, i32) {
    %c0_i32 = arith.constant 0 : i32
    %c0_i32_0 = arith.constant 0 : i32
    %c0_i32_1 = arith.constant 0 : i32
    return %c0_i32, %c0_i32_0 : i32, i32
  }
  func.func @transform_8(%arg0: i32) -> (i32, i32) {
    %c0_i32 = arith.constant 0 : i32
    %c0_i32_0 = arith.constant 0 : i32
    %c0_i32_1 = arith.constant 0 : i32
    return %c0_i32, %c0_i32_0 : i32, i32
  }
  func.func @transform_9(%arg0: i32) -> (i32, i32) {
    %c0_i32 = arith.constant 0 : i32
    %c0_i32_0 = arith.constant 0 : i32
    %c0_i32_1 = arith.constant 0 : i32
    return %c0_i32, %c0_i32_0 : i32, i32
  }
  func.func @transform_10(%arg0: i32) -> (i32, i32) {
    %c0_i32 = arith.constant 0 : i32
    %c0_i32_0 = arith.constant 0 : i32
    %c0_i32_1 = arith.constant 0 : i32
    return %c0_i32, %c0_i32_0 : i32, i32
  }
  func.func @transform_11(%arg0: i32) -> (i32, i32) {
    %c0_i32 = arith.constant 0 : i32
    %c0_i32_0 = arith.constant 0 : i32
    %c0_i32_1 = arith.constant 0 : i32
    return %c0_i32, %c0_i32_0 : i32, i32
  }
  func.func @transform_12(%arg0: i32) -> (i32, i32) {
    %c0_i32 = arith.constant 0 : i32
    %c0_i32_0 = arith.constant 0 : i32
    %c0_i32_1 = arith.constant 0 : i32
    return %c0_i32, %c0_i32_0 : i32, i32
  }
  func.func @transform_13(%arg0: i32) -> (i32, i32) {
    %c0_i32 = arith.constant 0 : i32
    %c0_i32_0 = arith.constant 0 : i32
    return %arg0, %c0_i32 : i32, i32
  }
}

</mosaic_0001>

<llo_original>
// kernel: wrench_encoder_forward.1
$region0: #{wrench_encoder_forward.1}
  #allocation0 [shape = 'u32[]', space=smem, size = 0x4, offset = 0x4, fixed_abs, tag = 'smem constant byte address 0x4 - core index']
  #allocation1 [shape = 'u32[144,128]{1,0:T(1,128)}', space=vmem, size = 0x12000, scoped, tag = 'internal scratch']
  %s0 = inlined_call_operand.vmem [shape: f32[8,8], index: 0, kind: input, shape index: {}]
  %s1 = inlined_call_operand.hbm [shape: bf16[8,1024], index: 1, kind: input, shape index: {}]
  %s2 = inlined_call_operand.vmem [shape: f32[1,1024], index: 2, kind: input, shape index: {}]
  %s3 = inlined_call_operand.hbm [shape: bf16[1024,512], index: 3, kind: input, shape index: {}]
  %s4 = inlined_call_operand.hbm [shape: f32[1,512], index: 4, kind: input, shape index: {}]
  %s5 = inlined_call_operand.hbm [shape: bf16[512,256], index: 5, kind: input, shape index: {}]
  %s6 = inlined_call_operand.hbm [shape: f32[1,256], index: 6, kind: input, shape index: {}]
  %s7 = inlined_call_operand.vmem [shape: bf16[256,128], index: 7, kind: input, shape index: {}]
  %s8 = inlined_call_operand.vmem [shape: f32[1,128], index: 8, kind: input, shape index: {}]
  %s9 = inlined_call_operand.vmem [shape: bf16[128,64], index: 9, kind: input, shape index: {}]
  %s10 = inlined_call_operand.vmem [shape: f32[1,64], index: 10, kind: input, shape index: {}]
  %s11 = inlined_call_operand.hbm [shape: bf16[64,128], index: 11, kind: input, shape index: {}]
  %s12 = inlined_call_operand.vmem [shape: f32[1,128], index: 12, kind: input, shape index: {}]
  %s13 = inlined_call_operand.vmem [shape: f32[8,128], index: 13, kind: output, shape index: {}]
  %s14 = sld [smem:[#allocation0]]
  $region86: #{wrench_encoder_forward.1} parent=0
    _
  %s16 = ssub.s32 1, %s14
  %s17 = scalar_select 0, %s16, %s14
  $region1: #{wrench_encoder_forward.1} parent=0
    #allocation2 [shape = 'u8[16384]{0}', space=vmem, size = 0x4000, scoped, tag = 'input window, operand 1, single buffered']
    #allocation3 [shape = 's32[1]{0}', space=sflag, size = 0x4, scoped, tag = 'scoped memory for wrench_encoder_forward.1']
    #allocation4 [shape = 'u8[1048576]{0}', space=vmem, size = 0x100000, scoped, tag = 'input window, operand 3, single buffered']
    #allocation5 [shape = 's32[1]{0}', space=sflag, size = 0x4, scoped, tag = 'scoped memory for wrench_encoder_forward.1']
    #allocation6 [shape = 'u8[2048]{0}', space=vmem, size = 0x800, scoped, tag = 'input window, operand 4, single buffered']
    #allocation7 [shape = 'u8[262144]{0}', space=vmem, size = 0x40000, scoped, tag = 'input window, operand 5, single buffered']
    #allocation8 [shape = 's32[1]{0}', space=sflag, size = 0x4, scoped, tag = 'scoped memory for wrench_encoder_forward.1']
    #allocation9 [shape = 'u8[1024]{0}', space=vmem, size = 0x400, scoped, tag = 'input window, operand 6, single buffered']
    #allocation10 [shape = 'u8[16384]{0}', space=vmem, size = 0x4000, scoped, tag = 'input window, operand 11, single buffered']
    #allocation11 [shape = 's32[1]{0}', space=sflag, size = 0x4, scoped, tag = 'scoped memory for wrench_encoder_forward.1']
    %18 = vsyncpa [#allocation3], 0
    %19 = vsyncpa [#allocation5], 0
    %20 = vsyncpa [#allocation8], 0
    %21 = vsyncpa [#allocation11], 0
    // Predicated region
    $region2: #{wrench_encoder_forward.1} parent=1 // pred_check
      _
    $region3: #{wrench_encoder_forward.1} parent=1 // pred_check_branch
      %23 = sbr.rel (0) target = $region5
    $region4: #{wrench_encoder_forward.1} parent=1 // pred_region
      _
    $region5: #{wrench_encoder_forward.1} parent=1 // pred_fallthru
      _
    // Predicated region
    $region6: #{wrench_encoder_forward.1} parent=1 // pred_check
      _
    $region7: #{wrench_encoder_forward.1} parent=1 // pred_check_branch
      %25 = sbr.rel (0) target = $region9
    $region8: #{wrench_encoder_forward.1} parent=1 // pred_region
      %s27 = ssub.s32 512, 512
      %28 = vsyncadd [#allocation3], %s27
      %s30 = sshll.u32 [#allocation2], 4
      %s31 = int_to_ptr.vmem [resolvable:$true] %s30
      %33 = dma.hbm_to_vmem [thread:$0]  %s1, 512, %s31, [#allocation3]
    $region9: #{wrench_encoder_forward.1} parent=1 // pred_fallthru
      _
    // Predicated region
    $region10: #{wrench_encoder_forward.1} parent=1 // pred_check
      _
    $region11: #{wrench_encoder_forward.1} parent=1 // pred_check_branch
      %35 = sbr.rel (0) target = $region13
    $region12: #{wrench_encoder_forward.1} parent=1 // pred_region
      _
    $region13: #{wrench_encoder_forward.1} parent=1 // pred_fallthru
      _
    // Predicated region
    $region14: #{wrench_encoder_forward.1} parent=1 // pred_check
      _
    $region15: #{wrench_encoder_forward.1} parent=1 // pred_check_branch
      %37 = sbr.rel (0) target = $region17
    $region16: #{wrench_encoder_forward.1} parent=1 // pred_region
      %s39 = ssub.s32 32768, 32768
      %40 = vsyncadd [#allocation5], %s39
      %s41 = sshll.u32 [#allocation4], 4
      %s42 = int_to_ptr.vmem [resolvable:$true] %s41
      %47 = dma.hbm_to_vmem [thread:$0]  %s3, 32768, %s42, [#allocation5], 256, 256, 16
    $region17: #{wrench_encoder_forward.1} parent=1 // pred_fallthru
      _
    // Predicated region
    $region18: #{wrench_encoder_forward.1} parent=1 // pred_check
      _
    $region19: #{wrench_encoder_forward.1} parent=1 // pred_check_branch
      %49 = sbr.rel (0) target = $region21
    $region20: #{wrench_encoder_forward.1} parent=1 // pred_region
      %s51 = ssub.s32 64, 64
      %52 = vsyncadd [#allocation5], %s51
      %s54 = sshll.u32 [#allocation6], 4
      %s55 = int_to_ptr.vmem [resolvable:$true] %s54
      %57 = dma.hbm_to_vmem [thread:$0]  %s4, 64, %s55, [#allocation5]
    $region21: #{wrench_encoder_forward.1} parent=1 // pred_fallthru
      _
    // Predicated region
    $region22: #{wrench_encoder_forward.1} parent=1 // pred_check
      _
    $region23: #{wrench_encoder_forward.1} parent=1 // pred_check_branch
      %59 = sbr.rel (0) target = $region25
    $region24: #{wrench_encoder_forward.1} parent=1 // pred_region
      %s61 = ssub.s32 8192, 8192
      %62 = vsyncadd [#allocation8], %s61
      %s63 = sshll.u32 [#allocation7], 4
      %s64 = int_to_ptr.vmem [resolvable:$true] %s63
      %69 = dma.hbm_to_vmem [thread:$0]  %s5, 8192, %s64, [#allocation8], 128, 128, 8
    $region25: #{wrench_encoder_forward.1} parent=1 // pred_fallthru
      _
    // Predicated region
    $region26: #{wrench_encoder_forward.1} parent=1 // pred_check
      _
    $region27: #{wrench_encoder_forward.1} parent=1 // pred_check_branch
      %71 = sbr.rel (0) target = $region29
    $region28: #{wrench_encoder_forward.1} parent=1 // pred_region
      %s73 = ssub.s32 32, 32
      %74 = vsyncadd [#allocation8], %s73
      %s76 = sshll.u32 [#allocation9], 4
      %s77 = int_to_ptr.vmem [resolvable:$true] %s76
      %79 = dma.hbm_to_vmem [thread:$0]  %s6, 32, %s77, [#allocation8]
    $region29: #{wrench_encoder_forward.1} parent=1 // pred_fallthru
      _
    // Predicated region
    $region30: #{wrench_encoder_forward.1} parent=1 // pred_check
      _
    $region31: #{wrench_encoder_forward.1} parent=1 // pred_check_branch
      %81 = sbr.rel (0) target = $region33
    $region32: #{wrench_encoder_forward.1} parent=1 // pred_region
      _
    $region33: #{wrench_encoder_forward.1} parent=1 // pred_fallthru
      _
    // Predicated region
    $region34: #{wrench_encoder_forward.1} parent=1 // pred_check
      _
    $region35: #{wrench_encoder_forward.1} parent=1 // pred_check_branch
      %83 = sbr.rel (0) target = $region37
    $region36: #{wrench_encoder_forward.1} parent=1 // pred_region
      _
    $region37: #{wrench_encoder_forward.1} parent=1 // pred_fallthru
      _
    // Predicated region
    $region38: #{wrench_encoder_forward.1} parent=1 // pred_check
      _
    $region39: #{wrench_encoder_forward.1} parent=1 // pred_check_branch
      %85 = sbr.rel (0) target = $region41
    $region40: #{wrench_encoder_forward.1} parent=1 // pred_region
      _
    $region41: #{wrench_encoder_forward.1} parent=1 // pred_fallthru
      _
    // Predicated region
    $region42: #{wrench_encoder_forward.1} parent=1 // pred_check
      _
    $region43: #{wrench_encoder_forward.1} parent=1 // pred_check_branch
      %87 = sbr.rel (0) target = $region45
    $region44: #{wrench_encoder_forward.1} parent=1 // pred_region
      _
    $region45: #{wrench_encoder_forward.1} parent=1 // pred_fallthru
      _
    // Predicated region
    $region46: #{wrench_encoder_forward.1} parent=1 // pred_check
      _
    $region47: #{wrench_encoder_forward.1} parent=1 // pred_check_branch
      %89 = sbr.rel (0) target = $region49
    $region48: #{wrench_encoder_forward.1} parent=1 // pred_region
      %s91 = ssub.s32 512, 512
      %92 = vsyncadd [#allocation11], %s91
      %s93 = sshll.u32 [#allocation10], 4
      %s94 = int_to_ptr.vmem [resolvable:$true] %s93
      %99 = dma.hbm_to_vmem [thread:$0]  %s11, 512, %s94, [#allocation11], 64, 64, 4
    $region49: #{wrench_encoder_forward.1} parent=1 // pred_fallthru
      _
    // Predicated region
    $region50: #{wrench_encoder_forward.1} parent=1 // pred_check
      _
    $region51: #{wrench_encoder_forward.1} parent=1 // pred_check_branch
      %101 = sbr.rel (0) target = $region53
    $region52: #{wrench_encoder_forward.1} parent=1 // pred_region
      _
    $region53: #{wrench_encoder_forward.1} parent=1 // pred_fallthru
      _
    // Predicated region
    $region54: #{wrench_encoder_forward.1} parent=1 // pred_check
      _
    $region55: #{wrench_encoder_forward.1} parent=1 // pred_check_branch
      %103 = sbr.rel (0) target = $region57
    $region56: #{wrench_encoder_forward.1} parent=1 // pred_region
      %104 = dma.done [#allocation3], 512
    $region57: #{wrench_encoder_forward.1} parent=1 // pred_fallthru
      _
    // Predicated region
    $region58: #{wrench_encoder_forward.1} parent=1 // pred_check
      _
    $region59: #{wrench_encoder_forward.1} parent=1 // pred_check_branch
      %106 = sbr.rel (0) target = $region61
    $region60: #{wrench_encoder_forward.1} parent=1 // pred_region
      %107 = dma.done [#allocation5], 32768
    $region61: #{wrench_encoder_forward.1} parent=1 // pred_fallthru
      _
    // Predicated region
    $region62: #{wrench_encoder_forward.1} parent=1 // pred_check
      _
    $region63: #{wrench_encoder_forward.1} parent=1 // pred_check_branch
      %109 = sbr.rel (0) target = $region65
    $region64: #{wrench_encoder_forward.1} parent=1 // pred_region
      %110 = dma.done [#allocation5], 64
    $region65: #{wrench_encoder_forward.1} parent=1 // pred_fallthru
      _
    // Predicated region
    $region66: #{wrench_encoder_forward.1} parent=1 // pred_check
      _
    $region67: #{wrench_encoder_forward.1} parent=1 // pred_check_branch
      %112 = sbr.rel (0) target = $region69
    $region68: #{wrench_encoder_forward.1} parent=1 // pred_region
      %113 = dma.done [#allocation8], 8192
    $region69: #{wrench_encoder_forward.1} parent=1 // pred_fallthru
      _
    // Predicated region
    $region70: #{wrench_encoder_forward.1} parent=1 // pred_check
      _
    $region71: #{wrench_encoder_forward.1} parent=1 // pred_check_branch
      %115 = sbr.rel (0) target = $region73
    $region72: #{wrench_encoder_forward.1} parent=1 // pred_region
      %116 = dma.done [#allocation8], 32
    $region73: #{wrench_encoder_forward.1} parent=1 // pred_fallthru
      _
    // Predicated region
    $region74: #{wrench_encoder_forward.1} parent=1 // pred_check
      _
    $region75: #{wrench_encoder_forward.1} parent=1 // pred_check_branch
      %118 = sbr.rel (0) target = $region77
    $region76: #{wrench_encoder_forward.1} parent=1 // pred_region
      %119 = dma.done [#allocation11], 512
    $region77: #{wrench_encoder_forward.1} parent=1 // pred_fallthru
      _
    %v121 = vld [vmem:[%s0] sm:$0xff]
    %v122 = vpack.c.bf16 %v121, %v121
    %v123 = vld [vmem:[#allocation2] sm:$0xff]
    %v124 = vld [vmem:[#allocation2 + $0x8] sm:$0xff]
    %v125 = vld [vmem:[#allocation2 + $0x10] sm:$0xff]
    %v126 = vld [vmem:[#allocation2 + $0x18] sm:$0xff]
    %v127 = vld [vmem:[%s2] sm:$0xff]
    %v129 = vlaneseq
    %v130 = vshrl.u32 %v129, 7
    %v131 = vsub.s32 0, %v130
    %v132 = vrot.slane %v127, %v131
    %v133 = vlaneseq
    %v134 = vshrl.u32 %v133, 7
    %v135 = vsub.s32 1, %v134
    %v136 = vrot.slane %v127, %v135
    %v137 = vlaneseq
    %v138 = vshrl.u32 %v137, 7
    %v139 = vsub.s32 2, %v138
    %v140 = vrot.slane %v127, %v139
    %v141 = vlaneseq
    %v142 = vshrl.u32 %v141, 7
    %v143 = vsub.s32 3, %v142
    %v144 = vrot.slane %v127, %v143
    %v145 = vlaneseq
    %v146 = vshrl.u32 %v145, 7
    %v147 = vsub.s32 4, %v146
    %v148 = vrot.slane %v127, %v147
    %v149 = vlaneseq
    %v150 = vshrl.u32 %v149, 7
    %v151 = vsub.s32 5, %v150
    %v152 = vrot.slane %v127, %v151
    %v153 = vlaneseq
    %v154 = vshrl.u32 %v153, 7
    %v155 = vsub.s32 6, %v154
    %v156 = vrot.slane %v127, %v155
    %v157 = vlaneseq
    %v158 = vshrl.u32 %v157, 7
    %v159 = vsub.s32 7, %v158
    %v160 = vrot.slane %v127, %v159
    %v173 = vunpack.c.l.b16 %v123
    %v174 = vunpack.c.h.b16 %v123
    %v175 = vunpack.c.l.b16 %v124
    %v176 = vunpack.c.h.b16 %v124
    %v177 = vunpack.c.l.b16 %v125
    %v178 = vunpack.c.h.b16 %v125
    %v179 = vunpack.c.l.b16 %v126
    %v180 = vunpack.c.h.b16 %v126
    %v181 = vpack.c.b16 %v173, %v173
    %v182 = vpack.c.b16 %v174, %v174
    %v183 = vpack.c.b16 %v175, %v175
    %v184 = vpack.c.b16 %v176, %v176
    %v185 = vpack.c.b16 %v177, %v177
    %v186 = vpack.c.b16 %v178, %v178
    %v187 = vpack.c.b16 %v179, %v179
    %v188 = vpack.c.b16 %v180, %v180
    %vm189 = vcmask 64512
    %v191 = vsel %vm189, %v122, 0
    %vm193 = vcmask 1043456
    %v195 = vsel %vm193, %v181, 0
    %v198 = vsel %vm193, %v182, 0
    %v201 = vsel %vm193, %v183, 0
    %v204 = vsel %vm193, %v184, 0
    %v207 = vsel %vm193, %v185, 0
    %v210 = vsel %vm193, %v186, 0
    %v213 = vsel %vm193, %v187, 0
    %v216 = vsel %vm193, %v188, 0
    %218 = vmatprep.subr.bf16.mxu0 %v198
    %219 = vmatpush1.bf16.msra.mxu0 %v195
    %220 = vmatprep.subr.bf16.mxu0 0
    %221 = vmatpush1.bf16.msra.mxu0 0
    %222 = vmatprep.subr.bf16.mxu0 0
    %223 = vmatpush1.bf16.msra.mxu0 0
    %224 = vmatprep.subr.bf16.mxu0 0
    %225 = vmatpush1.bf16.msra.mxu0 0
    %226 = vmatprep.subr.bf16.mxu0 0
    %227 = vmatpush1.bf16.msra.mxu0 0
    %228 = vmatprep.subr.bf16.mxu0 0
    %229 = vmatpush1.bf16.msra.mxu0 0
    %230 = vmatprep.subr.bf16.mxu0 0
    %231 = vmatpush1.bf16.msra.mxu0 0
    %232 = vmatprep.subr.bf16.mxu0 0
    %233 = vmatpush1.bf16.msra.mxu0 0
    %234 = vmatprep.subr.bf16.mxu0 0
    %235 = vmatpush1.bf16.msra.mxu0 0
    %236 = vmatprep.subr.bf16.mxu0 0
    %237 = vmatpush1.bf16.msra.mxu0 0
    %238 = vmatprep.subr.bf16.mxu0 0
    %239 = vmatpush1.bf16.msra.mxu0 0
    %240 = vmatprep.subr.bf16.mxu0 0
    %241 = vmatpush1.bf16.msra.mxu0 0
    %242 = vmatprep.subr.bf16.mxu0 0
    %243 = vmatpush1.bf16.msra.mxu0 0
    %244 = vmatprep.subr.bf16.mxu0 0
    %245 = vmatpush1.bf16.msra.mxu0 0
    %246 = vmatprep.subr.bf16.mxu0 0
    %247 = vmatpush1.bf16.msra.mxu0 0
    %248 = vmatprep.subr.bf16.mxu0 0
    %249 = vmatpush1.bf16.msra.mxu0 0
    %250 = vmatprep.mubr.bf16.mxu0 0
    %251 = vmatmul.mubr.bf16.gmra.mrb[0].mxu0 %v191
    %v252 = vpop.f32.mrb[0].mxu0
    %v253 = vadd.f32 %v132, %v252
    %v254 = vpop.f32.mrb[0].mxu0
    %v255 = vadd.f32 %v136, %v254
    %v256 = vpop.f32.mrb[0].mxu0
    %v257 = vpop.f32.mrb[0].mxu0
    %258 = vdwg.mxu0
    %259 = vmatprep.subr.bf16.mxu0 %v204
    %260 = vmatpush1.bf16.msra.mxu0 %v201
    %261 = vmatprep.subr.bf16.mxu0 0
    %262 = vmatpush1.bf16.msra.mxu0 0
    %263 = vmatprep.subr.bf16.mxu0 0
    %264 = vmatpush1.bf16.msra.mxu0 0
    %265 = vmatprep.subr.bf16.mxu0 0
    %266 = vmatpush1.bf16.msra.mxu0 0
    %267 = vmatprep.subr.bf16.mxu0 0
    %268 = vmatpush1.bf16.msra.mxu0 0
    %269 = vmatprep.subr.bf16.mxu0 0
    %270 = vmatpush1.bf16.msra.mxu0 0
    %271 = vmatprep.subr.bf16.mxu0 0
    %272 = vmatpush1.bf16.msra.mxu0 0
    %273 = vmatprep.subr.bf16.mxu0 0
    %274 = vmatpush1.bf16.msra.mxu0 0
    %275 = vmatprep.subr.bf16.mxu0 0
    %276 = vmatpush1.bf16.msra.mxu0 0
    %277 = vmatprep.subr.bf16.mxu0 0
    %278 = vmatpush1.bf16.msra.mxu0 0
    %279 = vmatprep.subr.bf16.mxu0 0
    %280 = vmatpush1.bf16.msra.mxu0 0
    %281 = vmatprep.subr.bf16.mxu0 0
    %282 = vmatpush1.bf16.msra.mxu0 0
    %283 = vmatprep.subr.bf16.mxu0 0
    %284 = vmatpush1.bf16.msra.mxu0 0
    %285 = vmatprep.subr.bf16.mxu0 0
    %286 = vmatpush1.bf16.msra.mxu0 0
    %287 = vmatprep.subr.bf16.mxu0 0
    %288 = vmatpush1.bf16.msra.mxu0 0
    %289 = vmatprep.subr.bf16.mxu0 0
    %290 = vmatpush1.bf16.msra.mxu0 0
    %291 = vmatprep.mubr.bf16.mxu0 0
    %292 = vmatmul.mubr.bf16.gmra.mrb[0].mxu0 %v191
    %v293 = vpop.f32.mrb[0].mxu0
    %v294 = vadd.f32 %v140, %v293
    %v295 = vpop.f32.mrb[0].mxu0
    %v296 = vadd.f32 %v144, %v295
    %v297 = vpop.f32.mrb[0].mxu0
    %v298 = vpop.f32.mrb[0].mxu0
    %299 = vdwg.mxu0
    %300 = vmatprep.subr.bf16.mxu0 %v210
    %301 = vmatpush1.bf16.msra.mxu0 %v207
    %302 = vmatprep.subr.bf16.mxu0 0
    %303 = vmatpush1.bf16.msra.mxu0 0
    %304 = vmatprep.subr.bf16.mxu0 0
    %305 = vmatpush1.bf16.msra.mxu0 0
    %306 = vmatprep.subr.bf16.mxu0 0
    %307 = vmatpush1.bf16.msra.mxu0 0
    %308 = vmatprep.subr.bf16.mxu0 0
    %309 = vmatpush1.bf16.msra.mxu0 0
    %310 = vmatprep.subr.bf16.mxu0 0
    %311 = vmatpush1.bf16.msra.mxu0 0
    %312 = vmatprep.subr.bf16.mxu0 0
    %313 = vmatpush1.bf16.msra.mxu0 0
    %314 = vmatprep.subr.bf16.mxu0 0
    %315 = vmatpush1.bf16.msra.mxu0 0
    %316 = vmatprep.subr.bf16.mxu0 0
    %317 = vmatpush1.bf16.msra.mxu0 0
    %318 = vmatprep.subr.bf16.mxu0 0
    %319 = vmatpush1.bf16.msra.mxu0 0
    %320 = vmatprep.subr.bf16.mxu0 0
    %321 = vmatpush1.bf16.msra.mxu0 0
    %322 = vmatprep.subr.bf16.mxu0 0
    %323 = vmatpush1.bf16.msra.mxu0 0
    %324 = vmatprep.subr.bf16.mxu0 0
    %325 = vmatpush1.bf16.msra.mxu0 0
    %326 = vmatprep.subr.bf16.mxu0 0
    %327 = vmatpush1.bf16.msra.mxu0 0
    %328 = vmatprep.subr.bf16.mxu0 0
    %329 = vmatpush1.bf16.msra.mxu0 0
    %330 = vmatprep.subr.bf16.mxu0 0
    %331 = vmatpush1.bf16.msra.mxu0 0
    %332 = vmatprep.mubr.bf16.mxu0 0
    %333 = vmatmul.mubr.bf16.gmra.mrb[0].mxu0 %v191
    %v334 = vpop.f32.mrb[0].mxu0
    %v335 = vadd.f32 %v148, %v334
    %v336 = vpop.f32.mrb[0].mxu0
    %v337 = vadd.f32 %v152, %v336
    %v338 = vpop.f32.mrb[0].mxu0
    %v339 = vpop.f32.mrb[0].mxu0
    %340 = vdwg.mxu0
    %341 = vmatprep.subr.bf16.mxu0 %v216
    %342 = vmatpush1.bf16.msra.mxu0 %v213
    %343 = vmatprep.subr.bf16.mxu0 0
    %344 = vmatpush1.bf16.msra.mxu0 0
    %345 = vmatprep.subr.bf16.mxu0 0
    %346 = vmatpush1.bf16.msra.mxu0 0
    %347 = vmatprep.subr.bf16.mxu0 0
    %348 = vmatpush1.bf16.msra.mxu0 0
    %349 = vmatprep.subr.bf16.mxu0 0
    %350 = vmatpush1.bf16.msra.mxu0 0
    %351 = vmatprep.subr.bf16.mxu0 0
    %352 = vmatpush1.bf16.msra.mxu0 0
    %353 = vmatprep.subr.bf16.mxu0 0
    %354 = vmatpush1.bf16.msra.mxu0 0
    %355 = vmatprep.subr.bf16.mxu0 0
    %356 = vmatpush1.bf16.msra.mxu0 0
    %357 = vmatprep.subr.bf16.mxu0 0
    %358 = vmatpush1.bf16.msra.mxu0 0
    %359 = vmatprep.subr.bf16.mxu0 0
    %360 = vmatpush1.bf16.msra.mxu0 0
    %361 = vmatprep.subr.bf16.mxu0 0
    %362 = vmatpush1.bf16.msra.mxu0 0
    %363 = vmatprep.subr.bf16.mxu0 0
    %364 = vmatpush1.bf16.msra.mxu0 0
    %365 = vmatprep.subr.bf16.mxu0 0
    %366 = vmatpush1.bf16.msra.mxu0 0
    %367 = vmatprep.subr.bf16.mxu0 0
    %368 = vmatpush1.bf16.msra.mxu0 0
    %369 = vmatprep.subr.bf16.mxu0 0
    %370 = vmatpush1.bf16.msra.mxu0 0
    %371 = vmatprep.subr.bf16.mxu0 0
    %372 = vmatpush1.bf16.msra.mxu0 0
    %373 = vmatprep.mubr.bf16.mxu0 0
    %374 = vmatmul.mubr.bf16.gmra.mrb[0].mxu0 %v191
    %v375 = vpop.f32.mrb[0].mxu0
    %v376 = vadd.f32 %v156, %v375
    %v377 = vpop.f32.mrb[0].mxu0
    %v378 = vadd.f32 %v160, %v377
    %v379 = vpop.f32.mrb[0].mxu0
    %v380 = vpop.f32.mrb[0].mxu0
    %381 = vdwg.mxu0
    %vm382 = vcmp.gt.f32.partialorder %v253, 0.0
    %vm383 = vcmp.gt.f32.partialorder %v255, 0.0
    %vm384 = vcmp.gt.f32.partialorder %v294, 0.0
    %vm385 = vcmp.gt.f32.partialorder %v296, 0.0
    %vm386 = vcmp.gt.f32.partialorder %v335, 0.0
    %vm387 = vcmp.gt.f32.partialorder %v337, 0.0
    %vm388 = vcmp.gt.f32.partialorder %v376, 0.0
    %vm389 = vcmp.gt.f32.partialorder %v378, 0.0
    %v390 = vmul.f32 %v253, 0.1
    %v391 = vmul.f32 %v255, 0.1
    %v392 = vmul.f32 %v294, 0.1
    %v393 = vmul.f32 %v296, 0.1
    %v394 = vmul.f32 %v335, 0.1
    %v395 = vmul.f32 %v337, 0.1
    %v396 = vmul.f32 %v376, 0.1
    %v397 = vmul.f32 %v378, 0.1
    %v398 = vsel %vm382, %v253, %v390
    %v399 = vsel %vm383, %v255, %v391
    %v400 = vsel %vm384, %v294, %v392
    %v401 = vsel %vm385, %v296, %v393
    %v402 = vsel %vm386, %v335, %v394
    %v403 = vsel %vm387, %v337, %v395
    %v404 = vsel %vm388, %v376, %v396
    %v405 = vsel %vm389, %v378, %v397
    %v406 = vpack.c.bf16 %v398, %v398
    %v407 = vpack.c.bf16 %v399, %v399
    %v408 = vpack.c.bf16 %v400, %v400
    %v409 = vpack.c.bf16 %v401, %v401
    %v410 = vpack.c.bf16 %v402, %v402
    %v411 = vpack.c.bf16 %v403, %v403
    %v412 = vpack.c.bf16 %v404, %v404
    %v413 = vpack.c.bf16 %v405, %v405
    %v414 = vld [vmem:[#allocation4] sm:$0xff]
    %v415 = vld [vmem:[#allocation4 + $0x8] sm:$0xff]
    %v416 = vld [vmem:[#allocation4 + $0x10] sm:$0xff]
    %v417 = vld [vmem:[#allocation4 + $0x18] sm:$0xff]
    %v418 = vld [vmem:[#allocation4 + $0x20] sm:$0xff]
    %v419 = vld [vmem:[#allocation4 + $0x28] sm:$0xff]
    %v420 = vld [vmem:[#allocation4 + $0x30] sm:$0xff]
    %v421 = vld [vmem:[#allocation4 + $0x38] sm:$0xff]
    %v422 = vld [vmem:[#allocation4 + $0x40] sm:$0xff]
    %v423 = vld [vmem:[#allocation4 + $0x48] sm:$0xff]
    %v424 = vld [vmem:[#allocation4 + $0x50] sm:$0xff]
    %v425 = vld [vmem:[#allocation4 + $0x58] sm:$0xff]
    %v426 = vld [vmem:[#allocation4 + $0x60] sm:$0xff]
    %v427 = vld [vmem:[#allocation4 + $0x68] sm:$0xff]
    %v428 = vld [vmem:[#allocation4 + $0x70] sm:$0xff]
    %v429 = vld [vmem:[#allocation4 + $0x78] sm:$0xff]
    %v430 = vld [vmem:[#allocation4 + $0x80] sm:$0xff]
    %v431 = vld [vmem:[#allocation4 + $0x88] sm:$0xff]
    %v432 = vld [vmem:[#allocation4 + $0x90] sm:$0xff]
    %v433 = vld [vmem:[#allocation4 + $0x98] sm:$0xff]
    %v434 = vld [vmem:[#allocation4 + $0xa0] sm:$0xff]
    %v435 = vld [vmem:[#allocation4 + $0xa8] sm:$0xff]
    %v436 = vld [vmem:[#allocation4 + $0xb0] sm:$0xff]
    %v437 = vld [vmem:[#allocation4 + $0xb8] sm:$0xff]
    %v438 = vld [vmem:[#allocation4 + $0xc0] sm:$0xff]
    %v439 = vld [vmem:[#allocation4 + $0xc8] sm:$0xff]
    %v440 = vld [vmem:[#allocation4 + $0xd0] sm:$0xff]
    %v441 = vld [vmem:[#allocation4 + $0xd8] sm:$0xff]
    %v442 = vld [vmem:[#allocation4 + $0xe0] sm:$0xff]
    %v443 = vld [vmem:[#allocation4 + $0xe8] sm:$0xff]
    %v444 = vld [vmem:[#allocation4 + $0xf0] sm:$0xff]
    %v445 = vld [vmem:[#allocation4 + $0xf8] sm:$0xff]
    %v446 = vld [vmem:[#allocation4 + $0x100] sm:$0xff]
    %v447 = vld [vmem:[#allocation4 + $0x108] sm:$0xff]
    %v448 = vld [vmem:[#allocation4 + $0x110] sm:$0xff]
    %v449 = vld [vmem:[#allocation4 + $0x118] sm:$0xff]
    %v450 = vld [vmem:[#allocation4 + $0x120] sm:$0xff]
    %v451 = vld [vmem:[#allocation4 + $0x128] sm:$0xff]
    %v452 = vld [vmem:[#allocation4 + $0x130] sm:$0xff]
    %v453 = vld [vmem:[#allocation4 + $0x138] sm:$0xff]
    %v454 = vld [vmem:[#allocation4 + $0x140] sm:$0xff]
    %v455 = vld [vmem:[#allocation4 + $0x148] sm:$0xff]
    %v456 = vld [vmem:[#allocation4 + $0x150] sm:$0xff]
    %v457 = vld [vmem:[#allocation4 + $0x158] sm:$0xff]
    %v458 = vld [vmem:[#allocation4 + $0x160] sm:$0xff]
    %v459 = vld [vmem:[#allocation4 + $0x168] sm:$0xff]
    %v460 = vld [vmem:[#allocation4 + $0x170] sm:$0xff]
    %v461 = vld [vmem:[#allocation4 + $0x178] sm:$0xff]
    %v462 = vld [vmem:[#allocation4 + $0x180] sm:$0xff]
    %v463 = vld [vmem:[#allocation4 + $0x188] sm:$0xff]
    %v464 = vld [vmem:[#allocation4 + $0x190] sm:$0xff]
    %v465 = vld [vmem:[#allocation4 + $0x198] sm:$0xff]
    %v466 = vld [vmem:[#allocation4 + $0x1a0] sm:$0xff]
    %v467 = vld [vmem:[#allocation4 + $0x1a8] sm:$0xff]
    %v468 = vld [vmem:[#allocation4 + $0x1b0] sm:$0xff]
    %v469 = vld [vmem:[#allocation4 + $0x1b8] sm:$0xff]
    %v470 = vld [vmem:[#allocation4 + $0x1c0] sm:$0xff]
    %v471 = vld [vmem:[#allocation4 + $0x1c8] sm:$0xff]
    %v472 = vld [vmem:[#allocation4 + $0x1d0] sm:$0xff]
    %v473 = vld [vmem:[#allocation4 + $0x1d8] sm:$0xff]
    %v474 = vld [vmem:[#allocation4 + $0x1e0] sm:$0xff]
    %v475 = vld [vmem:[#allocation4 + $0x1e8] sm:$0xff]
    %v476 = vld [vmem:[#allocation4 + $0x1f0] sm:$0xff]
    %v477 = vld [vmem:[#allocation4 + $0x1f8] sm:$0xff]
    %v478 = vld [vmem:[#allocation4 + $0x200] sm:$0xff]
    %v479 = vld [vmem:[#allocation4 + $0x208] sm:$0xff]
    %v480 = vld [vmem:[#allocation4 + $0x210] sm:$0xff]
    %v481 = vld [vmem:[#allocation4 + $0x218] sm:$0xff]
    %v482 = vld [vmem:[#allocation4 + $0x220] sm:$0xff]
    %v483 = vld [vmem:[#allocation4 + $0x228] sm:$0xff]
    %v484 = vld [vmem:[#allocation4 + $0x230] sm:$0xff]
    %v485 = vld [vmem:[#allocation4 + $0x238] sm:$0xff]
    %v486 = vld [vmem:[#allocation4 + $0x240] sm:$0xff]
    %v487 = vld [vmem:[#allocation4 + $0x248] sm:$0xff]
    %v488 = vld [vmem:[#allocation4 + $0x250] sm:$0xff]
    %v489 = vld [vmem:[#allocation4 + $0x258] sm:$0xff]
    %v490 = vld [vmem:[#allocation4 + $0x260] sm:$0xff]
    %v491 = vld [vmem:[#allocation4 + $0x268] sm:$0xff]
    %v492 = vld [vmem:[#allocation4 + $0x270] sm:$0xff]
    %v493 = vld [vmem:[#allocation4 + $0x278] sm:$0xff]
    %v494 = vld [vmem:[#allocation4 + $0x280] sm:$0xff]
    %v495 = vld [vmem:[#allocation4 + $0x288] sm:$0xff]
    %v496 = vld [vmem:[#allocation4 + $0x290] sm:$0xff]
    %v497 = vld [vmem:[#allocation4 + $0x298] sm:$0xff]
    %v498 = vld [vmem:[#allocation4 + $0x2a0] sm:$0xff]
    %v499 = vld [vmem:[#allocation4 + $0x2a8] sm:$0xff]
    %v500 = vld [vmem:[#allocation4 + $0x2b0] sm:$0xff]
    %v501 = vld [vmem:[#allocation4 + $0x2b8] sm:$0xff]
    %v502 = vld [vmem:[#allocation4 + $0x2c0] sm:$0xff]
    %v503 = vld [vmem:[#allocation4 + $0x2c8] sm:$0xff]
    %v504 = vld [vmem:[#allocation4 + $0x2d0] sm:$0xff]
    %v505 = vld [vmem:[#allocation4 + $0x2d8] sm:$0xff]
    %v506 = vld [vmem:[#allocation4 + $0x2e0] sm:$0xff]
    %v507 = vld [vmem:[#allocation4 + $0x2e8] sm:$0xff]
    %v508 = vld [vmem:[#allocation4 + $0x2f0] sm:$0xff]
    %v509 = vld [vmem:[#allocation4 + $0x2f8] sm:$0xff]
    %v510 = vld [vmem:[#allocation4 + $0x300] sm:$0xff]
    %v511 = vld [vmem:[#allocation4 + $0x308] sm:$0xff]
    %v512 = vld [vmem:[#allocation4 + $0x310] sm:$0xff]
    %v513 = vld [vmem:[#allocation4 + $0x318] sm:$0xff]
    %v514 = vld [vmem:[#allocation4 + $0x320] sm:$0xff]
    %v515 = vld [vmem:[#allocation4 + $0x328] sm:$0xff]
    %v516 = vld [vmem:[#allocation4 + $0x330] sm:$0xff]
    %v517 = vld [vmem:[#allocation4 + $0x338] sm:$0xff]
    %v518 = vld [vmem:[#allocation4 + $0x340] sm:$0xff]
    %v519 = vld [vmem:[#allocation4 + $0x348] sm:$0xff]
    %v520 = vld [vmem:[#allocation4 + $0x350] sm:$0xff]
    %v521 = vld [vmem:[#allocation4 + $0x358] sm:$0xff]
    %v522 = vld [vmem:[#allocation4 + $0x360] sm:$0xff]
    %v523 = vld [vmem:[#allocation4 + $0x368] sm:$0xff]
    %v524 = vld [vmem:[#allocation4 + $0x370] sm:$0xff]
    %v525 = vld [vmem:[#allocation4 + $0x378] sm:$0xff]
    %v526 = vld [vmem:[#allocation4 + $0x380] sm:$0xff]
    %v527 = vld [vmem:[#allocation4 + $0x388] sm:$0xff]
    %v528 = vld [vmem:[#allocation4 + $0x390] sm:$0xff]
    %v529 = vld [vmem:[#allocation4 + $0x398] sm:$0xff]
    %v530 = vld [vmem:[#allocation4 + $0x3a0] sm:$0xff]
    %v531 = vld [vmem:[#allocation4 + $0x3a8] sm:$0xff]
    %v532 = vld [vmem:[#allocation4 + $0x3b0] sm:$0xff]
    %v533 = vld [vmem:[#allocation4 + $0x3b8] sm:$0xff]
    %v534 = vld [vmem:[#allocation4 + $0x3c0] sm:$0xff]
    %v535 = vld [vmem:[#allocation4 + $0x3c8] sm:$0xff]
    %v536 = vld [vmem:[#allocation4 + $0x3d0] sm:$0xff]
    %v537 = vld [vmem:[#allocation4 + $0x3d8] sm:$0xff]
    %v538 = vld [vmem:[#allocation4 + $0x3e0] sm:$0xff]
    %v539 = vld [vmem:[#allocation4 + $0x3e8] sm:$0xff]
    %v540 = vld [vmem:[#allocation4 + $0x3f0] sm:$0xff]
    %v541 = vld [vmem:[#allocation4 + $0x3f8] sm:$0xff]
    %v542 = vld [vmem:[#allocation4 + $0x400] sm:$0xff]
    %v543 = vld [vmem:[#allocation4 + $0x408] sm:$0xff]
    %v544 = vld [vmem:[#allocation4 + $0x410] sm:$0xff]
    %v545 = vld [vmem:[#allocation4 + $0x418] sm:$0xff]
    %v546 = vld [vmem:[#allocation4 + $0x420] sm:$0xff]
    %v547 = vld [vmem:[#allocation4 + $0x428] sm:$0xff]
    %v548 = vld [vmem:[#allocation4 + $0x430] sm:$0xff]
    %v549 = vld [vmem:[#allocation4 + $0x438] sm:$0xff]
    %v550 = vld [vmem:[#allocation4 + $0x440] sm:$0xff]
    %v551 = vld [vmem:[#allocation4 + $0x448] sm:$0xff]
    %v552 = vld [vmem:[#allocation4 + $0x450] sm:$0xff]
    %v553 = vld [vmem:[#allocation4 + $0x458] sm:$0xff]
    %v554 = vld [vmem:[#allocation4 + $0x460] sm:$0xff]
    %v555 = vld [vmem:[#allocation4 + $0x468] sm:$0xff]
    %v556 = vld [vmem:[#allocation4 + $0x470] sm:$0xff]
    %v557 = vld [vmem:[#allocation4 + $0x478] sm:$0xff]
    %v558 = vld [vmem:[#allocation4 + $0x480] sm:$0xff]
    %v559 = vld [vmem:[#allocation4 + $0x488] sm:$0xff]
    %v560 = vld [vmem:[#allocation4 + $0x490] sm:$0xff]
    %v561 = vld [vmem:[#allocation4 + $0x498] sm:$0xff]
    %v562 = vld [vmem:[#allocation4 + $0x4a0] sm:$0xff]
    %v563 = vld [vmem:[#allocation4 + $0x4a8] sm:$0xff]
    %v564 = vld [vmem:[#allocation4 + $0x4b0] sm:$0xff]
    %v565 = vld [vmem:[#allocation4 + $0x4b8] sm:$0xff]
    %v566 = vld [vmem:[#allocation4 + $0x4c0] sm:$0xff]
    %v567 = vld [vmem:[#allocation4 + $0x4c8] sm:$0xff]
    %v568 = vld [vmem:[#allocation4 + $0x4d0] sm:$0xff]
    %v569 = vld [vmem:[#allocation4 + $0x4d8] sm:$0xff]
    %v570 = vld [vmem:[#allocation4 + $0x4e0] sm:$0xff]
    %v571 = vld [vmem:[#allocation4 + $0x4e8] sm:$0xff]
    %v572 = vld [vmem:[#allocation4 + $0x4f0] sm:$0xff]
    %v573 = vld [vmem:[#allocation4 + $0x4f8] sm:$0xff]
    %v574 = vld [vmem:[#allocation4 + $0x500] sm:$0xff]
    %v575 = vld [vmem:[#allocation4 + $0x508] sm:$0xff]
    %v576 = vld [vmem:[#allocation4 + $0x510] sm:$0xff]
    %v577 = vld [vmem:[#allocation4 + $0x518] sm:$0xff]
    %v578 = vld [vmem:[#allocation4 + $0x520] sm:$0xff]
    %v579 = vld [vmem:[#allocation4 + $0x528] sm:$0xff]
    %v580 = vld [vmem:[#allocation4 + $0x530] sm:$0xff]
    %v581 = vld [vmem:[#allocation4 + $0x538] sm:$0xff]
    %v582 = vld [vmem:[#allocation4 + $0x540] sm:$0xff]
    %v583 = vld [vmem:[#allocation4 + $0x548] sm:$0xff]
    %v584 = vld [vmem:[#allocation4 + $0x550] sm:$0xff]
    %v585 = vld [vmem:[#allocation4 + $0x558] sm:$0xff]
    %v586 = vld [vmem:[#allocation4 + $0x560] sm:$0xff]
    %v587 = vld [vmem:[#allocation4 + $0x568] sm:$0xff]
    %v588 = vld [vmem:[#allocation4 + $0x570] sm:$0xff]
    %v589 = vld [vmem:[#allocation4 + $0x578] sm:$0xff]
    %v590 = vld [vmem:[#allocation4 + $0x580] sm:$0xff]
    %v591 = vld [vmem:[#allocation4 + $0x588] sm:$0xff]
    %v592 = vld [vmem:[#allocation4 + $0x590] sm:$0xff]
    %v593 = vld [vmem:[#allocation4 + $0x598] sm:$0xff]
    %v594 = vld [vmem:[#allocation4 + $0x5a0] sm:$0xff]
    %v595 = vld [vmem:[#allocation4 + $0x5a8] sm:$0xff]
    %v596 = vld [vmem:[#allocation4 + $0x5b0] sm:$0xff]
    %v597 = vld [vmem:[#allocation4 + $0x5b8] sm:$0xff]
    %v598 = vld [vmem:[#allocation4 + $0x5c0] sm:$0xff]
    %v599 = vld [vmem:[#allocation4 + $0x5c8] sm:$0xff]
    %v600 = vld [vmem:[#allocation4 + $0x5d0] sm:$0xff]
    %v601 = vld [vmem:[#allocation4 + $0x5d8] sm:$0xff]
    %v602 = vld [vmem:[#allocation4 + $0x5e0] sm:$0xff]
    %v603 = vld [vmem:[#allocation4 + $0x5e8] sm:$0xff]
    %v604 = vld [vmem:[#allocation4 + $0x5f0] sm:$0xff]
    %v605 = vld [vmem:[#allocation4 + $0x5f8] sm:$0xff]
    %v606 = vld [vmem:[#allocation4 + $0x600] sm:$0xff]
    %v607 = vld [vmem:[#allocation4 + $0x608] sm:$0xff]
    %v608 = vld [vmem:[#allocation4 + $0x610] sm:$0xff]
    %v609 = vld [vmem:[#allocation4 + $0x618] sm:$0xff]
    %v610 = vld [vmem:[#allocation4 + $0x620] sm:$0xff]
    %v611 = vld [vmem:[#allocation4 + $0x628] sm:$0xff]
    %v612 = vld [vmem:[#allocation4 + $0x630] sm:$0xff]
    %v613 = vld [vmem:[#allocation4 + $0x638] sm:$0xff]
    %v614 = vld [vmem:[#allocation4 + $0x640] sm:$0xff]
    %v615 = vld [vmem:[#allocation4 + $0x648] sm:$0xff]
    %v616 = vld [vmem:[#allocation4 + $0x650] sm:$0xff]
    %v617 = vld [vmem:[#allocation4 + $0x658] sm:$0xff]
    %v618 = vld [vmem:[#allocation4 + $0x660] sm:$0xff]
    %v619 = vld [vmem:[#allocation4 + $0x668] sm:$0xff]
    %v620 = vld [vmem:[#allocation4 + $0x670] sm:$0xff]
    %v621 = vld [vmem:[#allocation4 + $0x678] sm:$0xff]
    %v622 = vld [vmem:[#allocation4 + $0x680] sm:$0xff]
    %v623 = vld [vmem:[#allocation4 + $0x688] sm:$0xff]
    %v624 = vld [vmem:[#allocation4 + $0x690] sm:$0xff]
    %v625 = vld [vmem:[#allocation4 + $0x698] sm:$0xff]
    %v626 = vld [vmem:[#allocation4 + $0x6a0] sm:$0xff]
    %v627 = vld [vmem:[#allocation4 + $0x6a8] sm:$0xff]
    %v628 = vld [vmem:[#allocation4 + $0x6b0] sm:$0xff]
    %v629 = vld [vmem:[#allocation4 + $0x6b8] sm:$0xff]
    %v630 = vld [vmem:[#allocation4 + $0x6c0] sm:$0xff]
    %v631 = vld [vmem:[#allocation4 + $0x6c8] sm:$0xff]
    %v632 = vld [vmem:[#allocation4 + $0x6d0] sm:$0xff]
    %v633 = vld [vmem:[#allocation4 + $0x6d8] sm:$0xff]
    %v634 = vld [vmem:[#allocation4 + $0x6e0] sm:$0xff]
    %v635 = vld [vmem:[#allocation4 + $0x6e8] sm:$0xff]
    %v636 = vld [vmem:[#allocation4 + $0x6f0] sm:$0xff]
    %v637 = vld [vmem:[#allocation4 + $0x6f8] sm:$0xff]
    %v638 = vld [vmem:[#allocation4 + $0x700] sm:$0xff]
    %v639 = vld [vmem:[#allocation4 + $0x708] sm:$0xff]
    %v640 = vld [vmem:[#allocation4 + $0x710] sm:$0xff]
    %v641 = vld [vmem:[#allocation4 + $0x718] sm:$0xff]
    %v642 = vld [vmem:[#allocation4 + $0x720] sm:$0xff]
    %v643 = vld [vmem:[#allocation4 + $0x728] sm:$0xff]
    %v644 = vld [vmem:[#allocation4 + $0x730] sm:$0xff]
    %v645 = vld [vmem:[#allocation4 + $0x738] sm:$0xff]
    %v646 = vld [vmem:[#allocation4 + $0x740] sm:$0xff]
    %v647 = vld [vmem:[#allocation4 + $0x748] sm:$0xff]
    %v648 = vld [vmem:[#allocation4 + $0x750] sm:$0xff]
    %v649 = vld [vmem:[#allocation4 + $0x758] sm:$0xff]
    %v650 = vld [vmem:[#allocation4 + $0x760] sm:$0xff]
    %v651 = vld [vmem:[#allocation4 + $0x768] sm:$0xff]
    %v652 = vld [vmem:[#allocation4 + $0x770] sm:$0xff]
    %v653 = vld [vmem:[#allocation4 + $0x778] sm:$0xff]
    %v654 = vld [vmem:[#allocation4 + $0x780] sm:$0xff]
    %v655 = vld [vmem:[#allocation4 + $0x788] sm:$0xff]
    %v656 = vld [vmem:[#allocation4 + $0x790] sm:$0xff]
    %v657 = vld [vmem:[#allocation4 + $0x798] sm:$0xff]
    %v658 = vld [vmem:[#allocation4 + $0x7a0] sm:$0xff]
    %v659 = vld [vmem:[#allocation4 + $0x7a8] sm:$0xff]
    %v660 = vld [vmem:[#allocation4 + $0x7b0] sm:$0xff]
    %v661 = vld [vmem:[#allocation4 + $0x7b8] sm:$0xff]
    %v662 = vld [vmem:[#allocation4 + $0x7c0] sm:$0xff]
    %v663 = vld [vmem:[#allocation4 + $0x7c8] sm:$0xff]
    %v664 = vld [vmem:[#allocation4 + $0x7d0] sm:$0xff]
    %v665 = vld [vmem:[#allocation4 + $0x7d8] sm:$0xff]
    %v666 = vld [vmem:[#allocation4 + $0x7e0] sm:$0xff]
    %v667 = vld [vmem:[#allocation4 + $0x7e8] sm:$0xff]
    %v668 = vld [vmem:[#allocation4 + $0x7f0] sm:$0xff]
    %v669 = vld [vmem:[#allocation4 + $0x7f8] sm:$0xff]
    %v670 = vld [vmem:[#allocation6] sm:$0xf]
    %v672 = vlaneseq
    %v673 = vshrl.u32 %v672, 7
    %v674 = vsub.s32 0, %v673
    %v675 = vrot.slane %v670, %v674
    %v676 = vlaneseq
    %v677 = vshrl.u32 %v676, 7
    %v678 = vsub.s32 1, %v677
    %v679 = vrot.slane %v670, %v678
    %v680 = vlaneseq
    %v681 = vshrl.u32 %v680, 7
    %v682 = vsub.s32 2, %v681
    %v683 = vrot.slane %v670, %v682
    %v684 = vlaneseq
    %v685 = vshrl.u32 %v684, 7
    %v686 = vsub.s32 3, %v685
    %v687 = vrot.slane %v670, %v686
    %v948 = vunpack.c.l.b16 %v414
    %v949 = vunpack.c.h.b16 %v414
    %v950 = vunpack.c.l.b16 %v415
    %v951 = vunpack.c.h.b16 %v415
    %v952 = vunpack.c.l.b16 %v416
    %v953 = vunpack.c.h.b16 %v416
    %v954 = vunpack.c.l.b16 %v417
    %v955 = vunpack.c.h.b16 %v417
    %v956 = vunpack.c.l.b16 %v418
    %v957 = vunpack.c.h.b16 %v418
    %v958 = vunpack.c.l.b16 %v419
    %v959 = vunpack.c.h.b16 %v419
    %v960 = vunpack.c.l.b16 %v420
    %v961 = vunpack.c.h.b16 %v420
    %v962 = vunpack.c.l.b16 %v421
    %v963 = vunpack.c.h.b16 %v421
    %v964 = vunpack.c.l.b16 %v422
    %v965 = vunpack.c.h.b16 %v422
    %v966 = vunpack.c.l.b16 %v423
    %v967 = vunpack.c.h.b16 %v423
    %v968 = vunpack.c.l.b16 %v424
    %v969 = vunpack.c.h.b16 %v424
    %v970 = vunpack.c.l.b16 %v425
    %v971 = vunpack.c.h.b16 %v425
    %v972 = vunpack.c.l.b16 %v426
    %v973 = vunpack.c.h.b16 %v426
    %v974 = vunpack.c.l.b16 %v427
    %v975 = vunpack.c.h.b16 %v427
    %v976 = vunpack.c.l.b16 %v428
    %v977 = vunpack.c.h.b16 %v428
    %v978 = vunpack.c.l.b16 %v429
    %v979 = vunpack.c.h.b16 %v429
    %v980 = vunpack.c.l.b16 %v430
    %v981 = vunpack.c.h.b16 %v430
    %v982 = vunpack.c.l.b16 %v431
    %v983 = vunpack.c.h.b16 %v431
    %v984 = vunpack.c.l.b16 %v432
    %v985 = vunpack.c.h.b16 %v432
    %v986 = vunpack.c.l.b16 %v433
    %v987 = vunpack.c.h.b16 %v433
    %v988 = vunpack.c.l.b16 %v434
    %v989 = vunpack.c.h.b16 %v434
    %v990 = vunpack.c.l.b16 %v435
    %v991 = vunpack.c.h.b16 %v435
    %v992 = vunpack.c.l.b16 %v436
    %v993 = vunpack.c.h.b16 %v436
    %v994 = vunpack.c.l.b16 %v437
    %v995 = vunpack.c.h.b16 %v437
    %v996 = vunpack.c.l.b16 %v438
    %v997 = vunpack.c.h.b16 %v438
    %v998 = vunpack.c.l.b16 %v439
    %v999 = vunpack.c.h.b16 %v439
    %v1000 = vunpack.c.l.b16 %v440
    %v1001 = vunpack.c.h.b16 %v440
    %v1002 = vunpack.c.l.b16 %v441
    %v1003 = vunpack.c.h.b16 %v441
    %v1004 = vunpack.c.l.b16 %v442
    %v1005 = vunpack.c.h.b16 %v442
    %v1006 = vunpack.c.l.b16 %v443
    %v1007 = vunpack.c.h.b16 %v443
    %v1008 = vunpack.c.l.b16 %v444
    %v1009 = vunpack.c.h.b16 %v444
    %v1010 = vunpack.c.l.b16 %v445
    %v1011 = vunpack.c.h.b16 %v445
    %v1012 = vunpack.c.l.b16 %v446
    %v1013 = vunpack.c.h.b16 %v446
    %v1014 = vunpack.c.l.b16 %v447
    %v1015 = vunpack.c.h.b16 %v447
    %v1016 = vunpack.c.l.b16 %v448
    %v1017 = vunpack.c.h.b16 %v448
    %v1018 = vunpack.c.l.b16 %v449
    %v1019 = vunpack.c.h.b16 %v449
    %v1020 = vunpack.c.l.b16 %v450
    %v1021 = vunpack.c.h.b16 %v450
    %v1022 = vunpack.c.l.b16 %v451
    %v1023 = vunpack.c.h.b16 %v451
    %v1024 = vunpack.c.l.b16 %v452
    %v1025 = vunpack.c.h.b16 %v452
    %v1026 = vunpack.c.l.b16 %v453
    %v1027 = vunpack.c.h.b16 %v453
    %v1028 = vunpack.c.l.b16 %v454
    %v1029 = vunpack.c.h.b16 %v454
    %v1030 = vunpack.c.l.b16 %v455
    %v1031 = vunpack.c.h.b16 %v455
    %v1032 = vunpack.c.l.b16 %v456
    %v1033 = vunpack.c.h.b16 %v456
    %v1034 = vunpack.c.l.b16 %v457
    %v1035 = vunpack.c.h.b16 %v457
    %v1036 = vunpack.c.l.b16 %v458
    %v1037 = vunpack.c.h.b16 %v458
    %v1038 = vunpack.c.l.b16 %v459
    %v1039 = vunpack.c.h.b16 %v459
    %v1040 = vunpack.c.l.b16 %v460
    %v1041 = vunpack.c.h.b16 %v460
    %v1042 = vunpack.c.l.b16 %v461
    %v1043 = vunpack.c.h.b16 %v461
    %v1044 = vunpack.c.l.b16 %v462
    %v1045 = vunpack.c.h.b16 %v462
    %v1046 = vunpack.c.l.b16 %v463
    %v1047 = vunpack.c.h.b16 %v463
    %v1048 = vunpack.c.l.b16 %v464
    %v1049 = vunpack.c.h.b16 %v464
    %v1050 = vunpack.c.l.b16 %v465
    %v1051 = vunpack.c.h.b16 %v465
    %v1052 = vunpack.c.l.b16 %v466
    %v1053 = vunpack.c.h.b16 %v466
    %v1054 = vunpack.c.l.b16 %v467
    %v1055 = vunpack.c.h.b16 %v467
    %v1056 = vunpack.c.l.b16 %v468
    %v1057 = vunpack.c.h.b16 %v468
    %v1058 = vunpack.c.l.b16 %v469
    %v1059 = vunpack.c.h.b16 %v469
    %v1060 = vunpack.c.l.b16 %v470
    %v1061 = vunpack.c.h.b16 %v470
    %v1062 = vunpack.c.l.b16 %v471
    %v1063 = vunpack.c.h.b16 %v471
    %v1064 = vunpack.c.l.b16 %v472
    %v1065 = vunpack.c.h.b16 %v472
    %v1066 = vunpack.c.l.b16 %v473
    %v1067 = vunpack.c.h.b16 %v473
    %v1068 = vunpack.c.l.b16 %v474
    %v1069 = vunpack.c.h.b16 %v474
    %v1070 = vunpack.c.l.b16 %v475
    %v1071 = vunpack.c.h.b16 %v475
    %v1072 = vunpack.c.l.b16 %v476
    %v1073 = vunpack.c.h.b16 %v476
    %v1074 = vunpack.c.l.b16 %v477
    %v1075 = vunpack.c.h.b16 %v477
    %v1076 = vunpack.c.l.b16 %v478
    %v1077 = vunpack.c.h.b16 %v478
    %v1078 = vunpack.c.l.b16 %v479
    %v1079 = vunpack.c.h.b16 %v479
    %v1080 = vunpack.c.l.b16 %v480
    %v1081 = vunpack.c.h.b16 %v480
    %v1082 = vunpack.c.l.b16 %v481
    %v1083 = vunpack.c.h.b16 %v481
    %v1084 = vunpack.c.l.b16 %v482
    %v1085 = vunpack.c.h.b16 %v482
    %v1086 = vunpack.c.l.b16 %v483
    %v1087 = vunpack.c.h.b16 %v483
    %v1088 = vunpack.c.l.b16 %v484
    %v1089 = vunpack.c.h.b16 %v484
    %v1090 = vunpack.c.l.b16 %v485
    %v1091 = vunpack.c.h.b16 %v485
    %v1092 = vunpack.c.l.b16 %v486
    %v1093 = vunpack.c.h.b16 %v486
    %v1094 = vunpack.c.l.b16 %v487
    %v1095 = vunpack.c.h.b16 %v487
    %v1096 = vunpack.c.l.b16 %v488
    %v1097 = vunpack.c.h.b16 %v488
    %v1098 = vunpack.c.l.b16 %v489
    %v1099 = vunpack.c.h.b16 %v489
    %v1100 = vunpack.c.l.b16 %v490
    %v1101 = vunpack.c.h.b16 %v490
    %v1102 = vunpack.c.l.b16 %v491
    %v1103 = vunpack.c.h.b16 %v491
    %v1104 = vunpack.c.l.b16 %v492
    %v1105 = vunpack.c.h.b16 %v492
    %v1106 = vunpack.c.l.b16 %v493
    %v1107 = vunpack.c.h.b16 %v493
    %v1108 = vunpack.c.l.b16 %v494
    %v1109 = vunpack.c.h.b16 %v494
    %v1110 = vunpack.c.l.b16 %v495
    %v1111 = vunpack.c.h.b16 %v495
    %v1112 = vunpack.c.l.b16 %v496
    %v1113 = vunpack.c.h.b16 %v496
    %v1114 = vunpack.c.l.b16 %v497
    %v1115 = vunpack.c.h.b16 %v497
    %v1116 = vunpack.c.l.b16 %v498
    %v1117 = vunpack.c.h.b16 %v498
    %v1118 = vunpack.c.l.b16 %v499
    %v1119 = vunpack.c.h.b16 %v499
    %v1120 = vunpack.c.l.b16 %v500
    %v1121 = vunpack.c.h.b16 %v500
    %v1122 = vunpack.c.l.b16 %v501
    %v1123 = vunpack.c.h.b16 %v501
    %v1124 = vunpack.c.l.b16 %v502
    %v1125 = vunpack.c.h.b16 %v502
    %v1126 = vunpack.c.l.b16 %v503
    %v1127 = vunpack.c.h.b16 %v503
    %v1128 = vunpack.c.l.b16 %v504
    %v1129 = vunpack.c.h.b16 %v504
    %v1130 = vunpack.c.l.b16 %v505
    %v1131 = vunpack.c.h.b16 %v505
    %v1132 = vunpack.c.l.b16 %v506
    %v1133 = vunpack.c.h.b16 %v506
    %v1134 = vunpack.c.l.b16 %v507
    %v1135 = vunpack.c.h.b16 %v507
    %v1136 = vunpack.c.l.b16 %v508
    %v1137 = vunpack.c.h.b16 %v508
    %v1138 = vunpack.c.l.b16 %v509
    %v1139 = vunpack.c.h.b16 %v509
    %v1140 = vunpack.c.l.b16 %v510
    %v1141 = vunpack.c.h.b16 %v510
    %v1142 = vunpack.c.l.b16 %v511
    %v1143 = vunpack.c.h.b16 %v511
    %v1144 = vunpack.c.l.b16 %v512
    %v1145 = vunpack.c.h.b16 %v512
    %v1146 = vunpack.c.l.b16 %v513
    %v1147 = vunpack.c.h.b16 %v513
    %v1148 = vunpack.c.l.b16 %v514
    %v1149 = vunpack.c.h.b16 %v514
    %v1150 = vunpack.c.l.b16 %v515
    %v1151 = vunpack.c.h.b16 %v515
    %v1152 = vunpack.c.l.b16 %v516
    %v1153 = vunpack.c.h.b16 %v516
    %v1154 = vunpack.c.l.b16 %v517
    %v1155 = vunpack.c.h.b16 %v517
    %v1156 = vunpack.c.l.b16 %v518
    %v1157 = vunpack.c.h.b16 %v518
    %v1158 = vunpack.c.l.b16 %v519
    %v1159 = vunpack.c.h.b16 %v519
    %v1160 = vunpack.c.l.b16 %v520
    %v1161 = vunpack.c.h.b16 %v520
    %v1162 = vunpack.c.l.b16 %v521
    %v1163 = vunpack.c.h.b16 %v521
    %v1164 = vunpack.c.l.b16 %v522
    %v1165 = vunpack.c.h.b16 %v522
    %v1166 = vunpack.c.l.b16 %v523
    %v1167 = vunpack.c.h.b16 %v523
    %v1168 = vunpack.c.l.b16 %v524
    %v1169 = vunpack.c.h.b16 %v524
    %v1170 = vunpack.c.l.b16 %v525
    %v1171 = vunpack.c.h.b16 %v525
    %v1172 = vunpack.c.l.b16 %v526
    %v1173 = vunpack.c.h.b16 %v526
    %v1174 = vunpack.c.l.b16 %v527
    %v1175 = vunpack.c.h.b16 %v527
    %v1176 = vunpack.c.l.b16 %v528
    %v1177 = vunpack.c.h.b16 %v528
    %v1178 = vunpack.c.l.b16 %v529
    %v1179 = vunpack.c.h.b16 %v529
    %v1180 = vunpack.c.l.b16 %v530
    %v1181 = vunpack.c.h.b16 %v530
    %v1182 = vunpack.c.l.b16 %v531
    %v1183 = vunpack.c.h.b16 %v531
    %v1184 = vunpack.c.l.b16 %v532
    %v1185 = vunpack.c.h.b16 %v532
    %v1186 = vunpack.c.l.b16 %v533
    %v1187 = vunpack.c.h.b16 %v533
    %v1188 = vunpack.c.l.b16 %v534
    %v1189 = vunpack.c.h.b16 %v534
    %v1190 = vunpack.c.l.b16 %v535
    %v1191 = vunpack.c.h.b16 %v535
    %v1192 = vunpack.c.l.b16 %v536
    %v1193 = vunpack.c.h.b16 %v536
    %v1194 = vunpack.c.l.b16 %v537
    %v1195 = vunpack.c.h.b16 %v537
    %v1196 = vunpack.c.l.b16 %v538
    %v1197 = vunpack.c.h.b16 %v538
    %v1198 = vunpack.c.l.b16 %v539
    %v1199 = vunpack.c.h.b16 %v539
    %v1200 = vunpack.c.l.b16 %v540
    %v1201 = vunpack.c.h.b16 %v540
    %v1202 = vunpack.c.l.b16 %v541
    %v1203 = vunpack.c.h.b16 %v541
    %v1204 = vunpack.c.l.b16 %v542
    %v1205 = vunpack.c.h.b16 %v542
    %v1206 = vunpack.c.l.b16 %v543
    %v1207 = vunpack.c.h.b16 %v543
    %v1208 = vunpack.c.l.b16 %v544
    %v1209 = vunpack.c.h.b16 %v544
    %v1210 = vunpack.c.l.b16 %v545
    %v1211 = vunpack.c.h.b16 %v545
    %v1212 = vunpack.c.l.b16 %v546
    %v1213 = vunpack.c.h.b16 %v546
    %v1214 = vunpack.c.l.b16 %v547
    %v1215 = vunpack.c.h.b16 %v547
    %v1216 = vunpack.c.l.b16 %v548
    %v1217 = vunpack.c.h.b16 %v548
    %v1218 = vunpack.c.l.b16 %v549
    %v1219 = vunpack.c.h.b16 %v549
    %v1220 = vunpack.c.l.b16 %v550
    %v1221 = vunpack.c.h.b16 %v550
    %v1222 = vunpack.c.l.b16 %v551
    %v1223 = vunpack.c.h.b16 %v551
    %v1224 = vunpack.c.l.b16 %v552
    %v1225 = vunpack.c.h.b16 %v552
    %v1226 = vunpack.c.l.b16 %v553
    %v1227 = vunpack.c.h.b16 %v553
    %v1228 = vunpack.c.l.b16 %v554
    %v1229 = vunpack.c.h.b16 %v554
    %v1230 = vunpack.c.l.b16 %v555
    %v1231 = vunpack.c.h.b16 %v555
    %v1232 = vunpack.c.l.b16 %v556
    %v1233 = vunpack.c.h.b16 %v556
    %v1234 = vunpack.c.l.b16 %v557
    %v1235 = vunpack.c.h.b16 %v557
    %v1236 = vunpack.c.l.b16 %v558
    %v1237 = vunpack.c.h.b16 %v558
    %v1238 = vunpack.c.l.b16 %v559
    %v1239 = vunpack.c.h.b16 %v559
    %v1240 = vunpack.c.l.b16 %v560
    %v1241 = vunpack.c.h.b16 %v560
    %v1242 = vunpack.c.l.b16 %v561
    %v1243 = vunpack.c.h.b16 %v561
    %v1244 = vunpack.c.l.b16 %v562
    %v1245 = vunpack.c.h.b16 %v562
    %v1246 = vunpack.c.l.b16 %v563
    %v1247 = vunpack.c.h.b16 %v563
    %v1248 = vunpack.c.l.b16 %v564
    %v1249 = vunpack.c.h.b16 %v564
    %v1250 = vunpack.c.l.b16 %v565
    %v1251 = vunpack.c.h.b16 %v565
    %v1252 = vunpack.c.l.b16 %v566
    %v1253 = vunpack.c.h.b16 %v566
    %v1254 = vunpack.c.l.b16 %v567
    %v1255 = vunpack.c.h.b16 %v567
    %v1256 = vunpack.c.l.b16 %v568
    %v1257 = vunpack.c.h.b16 %v568
    %v1258 = vunpack.c.l.b16 %v569
    %v1259 = vunpack.c.h.b16 %v569
    %v1260 = vunpack.c.l.b16 %v570
    %v1261 = vunpack.c.h.b16 %v570
    %v1262 = vunpack.c.l.b16 %v571
    %v1263 = vunpack.c.h.b16 %v571
    %v1264 = vunpack.c.l.b16 %v572
    %v1265 = vunpack.c.h.b16 %v572
    %v1266 = vunpack.c.l.b16 %v573
    %v1267 = vunpack.c.h.b16 %v573
    %v1268 = vunpack.c.l.b16 %v574
    %v1269 = vunpack.c.h.b16 %v574
    %v1270 = vunpack.c.l.b16 %v575
    %v1271 = vunpack.c.h.b16 %v575
    %v1272 = vunpack.c.l.b16 %v576
    %v1273 = vunpack.c.h.b16 %v576
    %v1274 = vunpack.c.l.b16 %v577
    %v1275 = vunpack.c.h.b16 %v577
    %v1276 = vunpack.c.l.b16 %v578
    %v1277 = vunpack.c.h.b16 %v578
    %v1278 = vunpack.c.l.b16 %v579
    %v1279 = vunpack.c.h.b16 %v579
    %v1280 = vunpack.c.l.b16 %v580
    %v1281 = vunpack.c.h.b16 %v580
    %v1282 = vunpack.c.l.b16 %v581
    %v1283 = vunpack.c.h.b16 %v581
    %v1284 = vunpack.c.l.b16 %v582
    %v1285 = vunpack.c.h.b16 %v582
    %v1286 = vunpack.c.l.b16 %v583
    %v1287 = vunpack.c.h.b16 %v583
    %v1288 = vunpack.c.l.b16 %v584
    %v1289 = vunpack.c.h.b16 %v584
    %v1290 = vunpack.c.l.b16 %v585
    %v1291 = vunpack.c.h.b16 %v585
    %v1292 = vunpack.c.l.b16 %v586
    %v1293 = vunpack.c.h.b16 %v586
    %v1294 = vunpack.c.l.b16 %v587
    %v1295 = vunpack.c.h.b16 %v587
    %v1296 = vunpack.c.l.b16 %v588
    %v1297 = vunpack.c.h.b16 %v588
    %v1298 = vunpack.c.l.b16 %v589
    %v1299 = vunpack.c.h.b16 %v589
    %v1300 = vunpack.c.l.b16 %v590
    %v1301 = vunpack.c.h.b16 %v590
    %v1302 = vunpack.c.l.b16 %v591
    %v1303 = vunpack.c.h.b16 %v591
    %v1304 = vunpack.c.l.b16 %v592
    %v1305 = vunpack.c.h.b16 %v592
    %v1306 = vunpack.c.l.b16 %v593
    %v1307 = vunpack.c.h.b16 %v593
    %v1308 = vunpack.c.l.b16 %v594
    %v1309 = vunpack.c.h.b16 %v594
    %v1310 = vunpack.c.l.b16 %v595
    %v1311 = vunpack.c.h.b16 %v595
    %v1312 = vunpack.c.l.b16 %v596
    %v1313 = vunpack.c.h.b16 %v596
    %v1314 = vunpack.c.l.b16 %v597
    %v1315 = vunpack.c.h.b16 %v597
    %v1316 = vunpack.c.l.b16 %v598
    %v1317 = vunpack.c.h.b16 %v598
    %v1318 = vunpack.c.l.b16 %v599
    %v1319 = vunpack.c.h.b16 %v599
    %v1320 = vunpack.c.l.b16 %v600
    %v1321 = vunpack.c.h.b16 %v600
    %v1322 = vunpack.c.l.b16 %v601
    %v1323 = vunpack.c.h.b16 %v601
    %v1324 = vunpack.c.l.b16 %v602
    %v1325 = vunpack.c.h.b16 %v602
    %v1326 = vunpack.c.l.b16 %v603
    %v1327 = vunpack.c.h.b16 %v603
    %v1328 = vunpack.c.l.b16 %v604
    %v1329 = vunpack.c.h.b16 %v604
    %v1330 = vunpack.c.l.b16 %v605
    %v1331 = vunpack.c.h.b16 %v605
    %v1332 = vunpack.c.l.b16 %v606
    %v1333 = vunpack.c.h.b16 %v606
    %v1334 = vunpack.c.l.b16 %v607
    %v1335 = vunpack.c.h.b16 %v607
    %v1336 = vunpack.c.l.b16 %v608
    %v1337 = vunpack.c.h.b16 %v608
    %v1338 = vunpack.c.l.b16 %v609
    %v1339 = vunpack.c.h.b16 %v609
    %v1340 = vunpack.c.l.b16 %v610
    %v1341 = vunpack.c.h.b16 %v610
    %v1342 = vunpack.c.l.b16 %v611
    %v1343 = vunpack.c.h.b16 %v611
    %v1344 = vunpack.c.l.b16 %v612
    %v1345 = vunpack.c.h.b16 %v612
    %v1346 = vunpack.c.l.b16 %v613
    %v1347 = vunpack.c.h.b16 %v613
    %v1348 = vunpack.c.l.b16 %v614
    %v1349 = vunpack.c.h.b16 %v614
    %v1350 = vunpack.c.l.b16 %v615
    %v1351 = vunpack.c.h.b16 %v615
    %v1352 = vunpack.c.l.b16 %v616
    %v1353 = vunpack.c.h.b16 %v616
    %v1354 = vunpack.c.l.b16 %v617
    %v1355 = vunpack.c.h.b16 %v617
    %v1356 = vunpack.c.l.b16 %v618
    %v1357 = vunpack.c.h.b16 %v618
    %v1358 = vunpack.c.l.b16 %v619
    %v1359 = vunpack.c.h.b16 %v619
    %v1360 = vunpack.c.l.b16 %v620
    %v1361 = vunpack.c.h.b16 %v620
    %v1362 = vunpack.c.l.b16 %v621
    %v1363 = vunpack.c.h.b16 %v621
    %v1364 = vunpack.c.l.b16 %v622
    %v1365 = vunpack.c.h.b16 %v622
    %v1366 = vunpack.c.l.b16 %v623
    %v1367 = vunpack.c.h.b16 %v623
    %v1368 = vunpack.c.l.b16 %v624
    %v1369 = vunpack.c.h.b16 %v624
    %v1370 = vunpack.c.l.b16 %v625
    %v1371 = vunpack.c.h.b16 %v625
    %v1372 = vunpack.c.l.b16 %v626
    %v1373 = vunpack.c.h.b16 %v626
    %v1374 = vunpack.c.l.b16 %v627
    %v1375 = vunpack.c.h.b16 %v627
    %v1376 = vunpack.c.l.b16 %v628
    %v1377 = vunpack.c.h.b16 %v628
    %v1378 = vunpack.c.l.b16 %v629
    %v1379 = vunpack.c.h.b16 %v629
    %v1380 = vunpack.c.l.b16 %v630
    %v1381 = vunpack.c.h.b16 %v630
    %v1382 = vunpack.c.l.b16 %v631
    %v1383 = vunpack.c.h.b16 %v631
    %v1384 = vunpack.c.l.b16 %v632
    %v1385 = vunpack.c.h.b16 %v632
    %v1386 = vunpack.c.l.b16 %v633
    %v1387 = vunpack.c.h.b16 %v633
    %v1388 = vunpack.c.l.b16 %v634
    %v1389 = vunpack.c.h.b16 %v634
    %v1390 = vunpack.c.l.b16 %v635
    %v1391 = vunpack.c.h.b16 %v635
    %v1392 = vunpack.c.l.b16 %v636
    %v1393 = vunpack.c.h.b16 %v636
    %v1394 = vunpack.c.l.b16 %v637
    %v1395 = vunpack.c.h.b16 %v637
    %v1396 = vunpack.c.l.b16 %v638
    %v1397 = vunpack.c.h.b16 %v638
    %v1398 = vunpack.c.l.b16 %v639
    %v1399 = vunpack.c.h.b16 %v639
    %v1400 = vunpack.c.l.b16 %v640
    %v1401 = vunpack.c.h.b16 %v640
    %v1402 = vunpack.c.l.b16 %v641
    %v1403 = vunpack.c.h.b16 %v641
    %v1404 = vunpack.c.l.b16 %v642
    %v1405 = vunpack.c.h.b16 %v642
    %v1406 = vunpack.c.l.b16 %v643
    %v1407 = vunpack.c.h.b16 %v643
    %v1408 = vunpack.c.l.b16 %v644
    %v1409 = vunpack.c.h.b16 %v644
    %v1410 = vunpack.c.l.b16 %v645
    %v1411 = vunpack.c.h.b16 %v645
    %v1412 = vunpack.c.l.b16 %v646
    %v1413 = vunpack.c.h.b16 %v646
    %v1414 = vunpack.c.l.b16 %v647
    %v1415 = vunpack.c.h.b16 %v647
    %v1416 = vunpack.c.l.b16 %v648
    %v1417 = vunpack.c.h.b16 %v648
    %v1418 = vunpack.c.l.b16 %v649
    %v1419 = vunpack.c.h.b16 %v649
    %v1420 = vunpack.c.l.b16 %v650
    %v1421 = vunpack.c.h.b16 %v650
    %v1422 = vunpack.c.l.b16 %v651
    %v1423 = vunpack.c.h.b16 %v651
    %v1424 = vunpack.c.l.b16 %v652
    %v1425 = vunpack.c.h.b16 %v652
    %v1426 = vunpack.c.l.b16 %v653
    %v1427 = vunpack.c.h.b16 %v653
    %v1428 = vunpack.c.l.b16 %v654
    %v1429 = vunpack.c.h.b16 %v654
    %v1430 = vunpack.c.l.b16 %v655
    %v1431 = vunpack.c.h.b16 %v655
    %v1432 = vunpack.c.l.b16 %v656
    %v1433 = vunpack.c.h.b16 %v656
    %v1434 = vunpack.c.l.b16 %v657
    %v1435 = vunpack.c.h.b16 %v657
    %v1436 = vunpack.c.l.b16 %v658
    %v1437 = vunpack.c.h.b16 %v658
    %v1438 = vunpack.c.l.b16 %v659
    %v1439 = vunpack.c.h.b16 %v659
    %v1440 = vunpack.c.l.b16 %v660
    %v1441 = vunpack.c.h.b16 %v660
    %v1442 = vunpack.c.l.b16 %v661
    %v1443 = vunpack.c.h.b16 %v661
    %v1444 = vunpack.c.l.b16 %v662
    %v1445 = vunpack.c.h.b16 %v662
    %v1446 = vunpack.c.l.b16 %v663
    %v1447 = vunpack.c.h.b16 %v663
    %v1448 = vunpack.c.l.b16 %v664
    %v1449 = vunpack.c.h.b16 %v664
    %v1450 = vunpack.c.l.b16 %v665
    %v1451 = vunpack.c.h.b16 %v665
    %v1452 = vunpack.c.l.b16 %v666
    %v1453 = vunpack.c.h.b16 %v666
    %v1454 = vunpack.c.l.b16 %v667
    %v1455 = vunpack.c.h.b16 %v667
    %v1456 = vunpack.c.l.b16 %v668
    %v1457 = vunpack.c.h.b16 %v668
    %v1458 = vunpack.c.l.b16 %v669
    %v1459 = vunpack.c.h.b16 %v669
    %v1460 = vpack.c.b16 %v952, %v948
    %v1461 = vpack.c.b16 %v953, %v949
    %v1462 = vpack.c.b16 %v954, %v950
    %v1463 = vpack.c.b16 %v955, %v951
    %v1464 = vpack.c.b16 %v960, %v956
    %v1465 = vpack.c.b16 %v961, %v957
    %v1466 = vpack.c.b16 %v962, %v958
    %v1467 = vpack.c.b16 %v963, %v959
    %v1468 = vpack.c.b16 %v968, %v964
    %v1469 = vpack.c.b16 %v969, %v965
    %v1470 = vpack.c.b16 %v970, %v966
    %v1471 = vpack.c.b16 %v971, %v967
    %v1472 = vpack.c.b16 %v976, %v972
    %v1473 = vpack.c.b16 %v977, %v973
    %v1474 = vpack.c.b16 %v978, %v974
    %v1475 = vpack.c.b16 %v979, %v975
    %v1476 = vpack.c.b16 %v984, %v980
    %v1477 = vpack.c.b16 %v985, %v981
    %v1478 = vpack.c.b16 %v986, %v982
    %v1479 = vpack.c.b16 %v987, %v983
    %v1480 = vpack.c.b16 %v992, %v988
    %v1481 = vpack.c.b16 %v993, %v989
    %v1482 = vpack.c.b16 %v994, %v990
    %v1483 = vpack.c.b16 %v995, %v991
    %v1484 = vpack.c.b16 %v1000, %v996
    %v1485 = vpack.c.b16 %v1001, %v997
    %v1486 = vpack.c.b16 %v1002, %v998
    %v1487 = vpack.c.b16 %v1003, %v999
    %v1488 = vpack.c.b16 %v1008, %v1004
    %v1489 = vpack.c.b16 %v1009, %v1005
    %v1490 = vpack.c.b16 %v1010, %v1006
    %v1491 = vpack.c.b16 %v1011, %v1007
    %v1492 = vpack.c.b16 %v1016, %v1012
    %v1493 = vpack.c.b16 %v1017, %v1013
    %v1494 = vpack.c.b16 %v1018, %v1014
    %v1495 = vpack.c.b16 %v1019, %v1015
    %v1496 = vpack.c.b16 %v1024, %v1020
    %v1497 = vpack.c.b16 %v1025, %v1021
    %v1498 = vpack.c.b16 %v1026, %v1022
    %v1499 = vpack.c.b16 %v1027, %v1023
    %v1500 = vpack.c.b16 %v1032, %v1028
    %v1501 = vpack.c.b16 %v1033, %v1029
    %v1502 = vpack.c.b16 %v1034, %v1030
    %v1503 = vpack.c.b16 %v1035, %v1031
    %v1504 = vpack.c.b16 %v1040, %v1036
    %v1505 = vpack.c.b16 %v1041, %v1037
    %v1506 = vpack.c.b16 %v1042, %v1038
    %v1507 = vpack.c.b16 %v1043, %v1039
    %v1508 = vpack.c.b16 %v1048, %v1044
    %v1509 = vpack.c.b16 %v1049, %v1045
    %v1510 = vpack.c.b16 %v1050, %v1046
    %v1511 = vpack.c.b16 %v1051, %v1047
    %v1512 = vpack.c.b16 %v1056, %v1052
    %v1513 = vpack.c.b16 %v1057, %v1053
    %v1514 = vpack.c.b16 %v1058, %v1054
    %v1515 = vpack.c.b16 %v1059, %v1055
    %v1516 = vpack.c.b16 %v1064, %v1060
    %v1517 = vpack.c.b16 %v1065, %v1061
    %v1518 = vpack.c.b16 %v1066, %v1062
    %v1519 = vpack.c.b16 %v1067, %v1063
    %v1520 = vpack.c.b16 %v1072, %v1068
    %v1521 = vpack.c.b16 %v1073, %v1069
    %v1522 = vpack.c.b16 %v1074, %v1070
    %v1523 = vpack.c.b16 %v1075, %v1071
    %v1524 = vpack.c.b16 %v1080, %v1076
    %v1525 = vpack.c.b16 %v1081, %v1077
    %v1526 = vpack.c.b16 %v1082, %v1078
    %v1527 = vpack.c.b16 %v1083, %v1079
    %v1528 = vpack.c.b16 %v1088, %v1084
    %v1529 = vpack.c.b16 %v1089, %v1085
    %v1530 = vpack.c.b16 %v1090, %v1086
    %v1531 = vpack.c.b16 %v1091, %v1087
    %v1532 = vpack.c.b16 %v1096, %v1092
    %v1533 = vpack.c.b16 %v1097, %v1093
    %v1534 = vpack.c.b16 %v1098, %v1094
    %v1535 = vpack.c.b16 %v1099, %v1095
    %v1536 = vpack.c.b16 %v1104, %v1100
    %v1537 = vpack.c.b16 %v1105, %v1101
    %v1538 = vpack.c.b16 %v1106, %v1102
    %v1539 = vpack.c.b16 %v1107, %v1103
    %v1540 = vpack.c.b16 %v1112, %v1108
    %v1541 = vpack.c.b16 %v1113, %v1109
    %v1542 = vpack.c.b16 %v1114, %v1110
    %v1543 = vpack.c.b16 %v1115, %v1111
    %v1544 = vpack.c.b16 %v1120, %v1116
    %v1545 = vpack.c.b16 %v1121, %v1117
    %v1546 = vpack.c.b16 %v1122, %v1118
    %v1547 = vpack.c.b16 %v1123, %v1119
    %v1548 = vpack.c.b16 %v1128, %v1124
    %v1549 = vpack.c.b16 %v1129, %v1125
    %v1550 = vpack.c.b16 %v1130, %v1126
    %v1551 = vpack.c.b16 %v1131, %v1127
    %v1552 = vpack.c.b16 %v1136, %v1132
    %v1553 = vpack.c.b16 %v1137, %v1133
    %v1554 = vpack.c.b16 %v1138, %v1134
    %v1555 = vpack.c.b16 %v1139, %v1135
    %v1556 = vpack.c.b16 %v1144, %v1140
    %v1557 = vpack.c.b16 %v1145, %v1141
    %v1558 = vpack.c.b16 %v1146, %v1142
    %v1559 = vpack.c.b16 %v1147, %v1143
    %v1560 = vpack.c.b16 %v1152, %v1148
    %v1561 = vpack.c.b16 %v1153, %v1149
    %v1562 = vpack.c.b16 %v1154, %v1150
    %v1563 = vpack.c.b16 %v1155, %v1151
    %v1564 = vpack.c.b16 %v1160, %v1156
    %v1565 = vpack.c.b16 %v1161, %v1157
    %v1566 = vpack.c.b16 %v1162, %v1158
    %v1567 = vpack.c.b16 %v1163, %v1159
    %v1568 = vpack.c.b16 %v1168, %v1164
    %v1569 = vpack.c.b16 %v1169, %v1165
    %v1570 = vpack.c.b16 %v1170, %v1166
    %v1571 = vpack.c.b16 %v1171, %v1167
    %v1572 = vpack.c.b16 %v1176, %v1172
    %v1573 = vpack.c.b16 %v1177, %v1173
    %v1574 = vpack.c.b16 %v1178, %v1174
    %v1575 = vpack.c.b16 %v1179, %v1175
    %v1576 = vpack.c.b16 %v1184, %v1180
    %v1577 = vpack.c.b16 %v1185, %v1181
    %v1578 = vpack.c.b16 %v1186, %v1182
    %v1579 = vpack.c.b16 %v1187, %v1183
    %v1580 = vpack.c.b16 %v1192, %v1188
    %v1581 = vpack.c.b16 %v1193, %v1189
    %v1582 = vpack.c.b16 %v1194, %v1190
    %v1583 = vpack.c.b16 %v1195, %v1191
    %v1584 = vpack.c.b16 %v1200, %v1196
    %v1585 = vpack.c.b16 %v1201, %v1197
    %v1586 = vpack.c.b16 %v1202, %v1198
    %v1587 = vpack.c.b16 %v1203, %v1199
    %v1588 = vpack.c.b16 %v1208, %v1204
    %v1589 = vpack.c.b16 %v1209, %v1205
    %v1590 = vpack.c.b16 %v1210, %v1206
    %v1591 = vpack.c.b16 %v1211, %v1207
    %v1592 = vpack.c.b16 %v1216, %v1212
    %v1593 = vpack.c.b16 %v1217, %v1213
    %v1594 = vpack.c.b16 %v1218, %v1214
    %v1595 = vpack.c.b16 %v1219, %v1215
    %v1596 = vpack.c.b16 %v1224, %v1220
    %v1597 = vpack.c.b16 %v1225, %v1221
    %v1598 = vpack.c.b16 %v1226, %v1222
    %v1599 = vpack.c.b16 %v1227, %v1223
    %v1600 = vpack.c.b16 %v1232, %v1228
    %v1601 = vpack.c.b16 %v1233, %v1229
    %v1602 = vpack.c.b16 %v1234, %v1230
    %v1603 = vpack.c.b16 %v1235, %v1231
    %v1604 = vpack.c.b16 %v1240, %v1236
    %v1605 = vpack.c.b16 %v1241, %v1237
    %v1606 = vpack.c.b16 %v1242, %v1238
    %v1607 = vpack.c.b16 %v1243, %v1239
    %v1608 = vpack.c.b16 %v1248, %v1244
    %v1609 = vpack.c.b16 %v1249, %v1245
    %v1610 = vpack.c.b16 %v1250, %v1246
    %v1611 = vpack.c.b16 %v1251, %v1247
    %v1612 = vpack.c.b16 %v1256, %v1252
    %v1613 = vpack.c.b16 %v1257, %v1253
    %v1614 = vpack.c.b16 %v1258, %v1254
    %v1615 = vpack.c.b16 %v1259, %v1255
    %v1616 = vpack.c.b16 %v1264, %v1260
    %v1617 = vpack.c.b16 %v1265, %v1261
    %v1618 = vpack.c.b16 %v1266, %v1262
    %v1619 = vpack.c.b16 %v1267, %v1263
    %v1620 = vpack.c.b16 %v1272, %v1268
    %v1621 = vpack.c.b16 %v1273, %v1269
    %v1622 = vpack.c.b16 %v1274, %v1270
    %v1623 = vpack.c.b16 %v1275, %v1271
    %v1624 = vpack.c.b16 %v1280, %v1276
    %v1625 = vpack.c.b16 %v1281, %v1277
    %v1626 = vpack.c.b16 %v1282, %v1278
    %v1627 = vpack.c.b16 %v1283, %v1279
    %v1628 = vpack.c.b16 %v1288, %v1284
    %v1629 = vpack.c.b16 %v1289, %v1285
    %v1630 = vpack.c.b16 %v1290, %v1286
    %v1631 = vpack.c.b16 %v1291, %v1287
    %v1632 = vpack.c.b16 %v1296, %v1292
    %v1633 = vpack.c.b16 %v1297, %v1293
    %v1634 = vpack.c.b16 %v1298, %v1294
    %v1635 = vpack.c.b16 %v1299, %v1295
    %v1636 = vpack.c.b16 %v1304, %v1300
    %v1637 = vpack.c.b16 %v1305, %v1301
    %v1638 = vpack.c.b16 %v1306, %v1302
    %v1639 = vpack.c.b16 %v1307, %v1303
    %v1640 = vpack.c.b16 %v1312, %v1308
    %v1641 = vpack.c.b16 %v1313, %v1309
    %v1642 = vpack.c.b16 %v1314, %v1310
    %v1643 = vpack.c.b16 %v1315, %v1311
    %v1644 = vpack.c.b16 %v1320, %v1316
    %v1645 = vpack.c.b16 %v1321, %v1317
    %v1646 = vpack.c.b16 %v1322, %v1318
    %v1647 = vpack.c.b16 %v1323, %v1319
    %v1648 = vpack.c.b16 %v1328, %v1324
    %v1649 = vpack.c.b16 %v1329, %v1325
    %v1650 = vpack.c.b16 %v1330, %v1326
    %v1651 = vpack.c.b16 %v1331, %v1327
    %v1652 = vpack.c.b16 %v1336, %v1332
    %v1653 = vpack.c.b16 %v1337, %v1333
    %v1654 = vpack.c.b16 %v1338, %v1334
    %v1655 = vpack.c.b16 %v1339, %v1335
    %v1656 = vpack.c.b16 %v1344, %v1340
    %v1657 = vpack.c.b16 %v1345, %v1341
    %v1658 = vpack.c.b16 %v1346, %v1342
    %v1659 = vpack.c.b16 %v1347, %v1343
    %v1660 = vpack.c.b16 %v1352, %v1348
    %v1661 = vpack.c.b16 %v1353, %v1349
    %v1662 = vpack.c.b16 %v1354, %v1350
    %v1663 = vpack.c.b16 %v1355, %v1351
    %v1664 = vpack.c.b16 %v1360, %v1356
    %v1665 = vpack.c.b16 %v1361, %v1357
    %v1666 = vpack.c.b16 %v1362, %v1358
    %v1667 = vpack.c.b16 %v1363, %v1359
    %v1668 = vpack.c.b16 %v1368, %v1364
    %v1669 = vpack.c.b16 %v1369, %v1365
    %v1670 = vpack.c.b16 %v1370, %v1366
    %v1671 = vpack.c.b16 %v1371, %v1367
    %v1672 = vpack.c.b16 %v1376, %v1372
    %v1673 = vpack.c.b16 %v1377, %v1373
    %v1674 = vpack.c.b16 %v1378, %v1374
    %v1675 = vpack.c.b16 %v1379, %v1375
    %v1676 = vpack.c.b16 %v1384, %v1380
    %v1677 = vpack.c.b16 %v1385, %v1381
    %v1678 = vpack.c.b16 %v1386, %v1382
    %v1679 = vpack.c.b16 %v1387, %v1383
    %v1680 = vpack.c.b16 %v1392, %v1388
    %v1681 = vpack.c.b16 %v1393, %v1389
    %v1682 = vpack.c.b16 %v1394, %v1390
    %v1683 = vpack.c.b16 %v1395, %v1391
    %v1684 = vpack.c.b16 %v1400, %v1396
    %v1685 = vpack.c.b16 %v1401, %v1397
    %v1686 = vpack.c.b16 %v1402, %v1398
    %v1687 = vpack.c.b16 %v1403, %v1399
    %v1688 = vpack.c.b16 %v1408, %v1404
    %v1689 = vpack.c.b16 %v1409, %v1405
    %v1690 = vpack.c.b16 %v1410, %v1406
    %v1691 = vpack.c.b16 %v1411, %v1407
    %v1692 = vpack.c.b16 %v1416, %v1412
    %v1693 = vpack.c.b16 %v1417, %v1413
    %v1694 = vpack.c.b16 %v1418, %v1414
    %v1695 = vpack.c.b16 %v1419, %v1415
    %v1696 = vpack.c.b16 %v1424, %v1420
    %v1697 = vpack.c.b16 %v1425, %v1421
    %v1698 = vpack.c.b16 %v1426, %v1422
    %v1699 = vpack.c.b16 %v1427, %v1423
    %v1700 = vpack.c.b16 %v1432, %v1428
    %v1701 = vpack.c.b16 %v1433, %v1429
    %v1702 = vpack.c.b16 %v1434, %v1430
    %v1703 = vpack.c.b16 %v1435, %v1431
    %v1704 = vpack.c.b16 %v1440, %v1436
    %v1705 = vpack.c.b16 %v1441, %v1437
    %v1706 = vpack.c.b16 %v1442, %v1438
    %v1707 = vpack.c.b16 %v1443, %v1439
    %v1708 = vpack.c.b16 %v1448, %v1444
    %v1709 = vpack.c.b16 %v1449, %v1445
    %v1710 = vpack.c.b16 %v1450, %v1446
    %v1711 = vpack.c.b16 %v1451, %v1447
    %v1712 = vpack.c.b16 %v1456, %v1452
    %v1713 = vpack.c.b16 %v1457, %v1453
    %v1714 = vpack.c.b16 %v1458, %v1454
    %v1715 = vpack.c.b16 %v1459, %v1455
    %1972 = vmatprep.subr.bf16.mxu0 %v1461
    %1973 = vmatpush1.bf16.msra.mxu0 %v1460
    %1974 = vmatprep.subr.bf16.mxu0 %v1465
    %1975 = vmatpush1.bf16.msra.mxu0 %v1464
    %1976 = vmatprep.subr.bf16.mxu0 %v1469
    %1977 = vmatpush1.bf16.msra.mxu0 %v1468
    %1978 = vmatprep.subr.bf16.mxu0 %v1473
    %1979 = vmatpush1.bf16.msra.mxu0 %v1472
    %1980 = vmatprep.subr.bf16.mxu0 %v1477
    %1981 = vmatpush1.bf16.msra.mxu0 %v1476
    %1982 = vmatprep.subr.bf16.mxu0 %v1481
    %1983 = vmatpush1.bf16.msra.mxu0 %v1480
    %1984 = vmatprep.subr.bf16.mxu0 %v1485
    %1985 = vmatpush1.bf16.msra.mxu0 %v1484
    %1986 = vmatprep.subr.bf16.mxu0 %v1489
    %1987 = vmatpush1.bf16.msra.mxu0 %v1488
    %1988 = vmatprep.subr.bf16.mxu0 %v1493
    %1989 = vmatpush1.bf16.msra.mxu0 %v1492
    %1990 = vmatprep.subr.bf16.mxu0 %v1497
    %1991 = vmatpush1.bf16.msra.mxu0 %v1496
    %1992 = vmatprep.subr.bf16.mxu0 %v1501
    %1993 = vmatpush1.bf16.msra.mxu0 %v1500
    %1994 = vmatprep.subr.bf16.mxu0 %v1505
    %1995 = vmatpush1.bf16.msra.mxu0 %v1504
    %1996 = vmatprep.subr.bf16.mxu0 %v1509
    %1997 = vmatpush1.bf16.msra.mxu0 %v1508
    %1998 = vmatprep.subr.bf16.mxu0 %v1513
    %1999 = vmatpush1.bf16.msra.mxu0 %v1512
    %2000 = vmatprep.subr.bf16.mxu0 %v1517
    %2001 = vmatpush1.bf16.msra.mxu0 %v1516
    %2002 = vmatprep.subr.bf16.mxu0 %v1521
    %2003 = vmatpush1.bf16.msra.mxu0 %v1520
    %2004 = vmatprep.mubr.bf16.mxu0 %v407
    %2005 = vmatmul.mubr.bf16.gmra.mrb[0].mxu0 %v406
    %v2006 = vpop.f32.mrb[0].mxu0
    %v2007 = vadd.f32 %v675, %v2006
    %v2008 = vpop.f32.mrb[0].mxu0
    %v2009 = vadd.f32 %v679, %v2008
    %v2010 = vpop.f32.mrb[0].mxu0
    %v2011 = vpop.f32.mrb[0].mxu0
    %2012 = vdwg.mxu0
    %2013 = vmatprep.subr.bf16.mxu0 %v1525
    %2014 = vmatpush1.bf16.msra.mxu0 %v1524
    %2015 = vmatprep.subr.bf16.mxu0 %v1529
    %2016 = vmatpush1.bf16.msra.mxu0 %v1528
    %2017 = vmatprep.subr.bf16.mxu0 %v1533
    %2018 = vmatpush1.bf16.msra.mxu0 %v1532
    %2019 = vmatprep.subr.bf16.mxu0 %v1537
    %2020 = vmatpush1.bf16.msra.mxu0 %v1536
    %2021 = vmatprep.subr.bf16.mxu0 %v1541
    %2022 = vmatpush1.bf16.msra.mxu0 %v1540
    %2023 = vmatprep.subr.bf16.mxu0 %v1545
    %2024 = vmatpush1.bf16.msra.mxu0 %v1544
    %2025 = vmatprep.subr.bf16.mxu0 %v1549
    %2026 = vmatpush1.bf16.msra.mxu0 %v1548
    %2027 = vmatprep.subr.bf16.mxu0 %v1553
    %2028 = vmatpush1.bf16.msra.mxu0 %v1552
    %2029 = vmatprep.subr.bf16.mxu0 %v1557
    %2030 = vmatpush1.bf16.msra.mxu0 %v1556
    %2031 = vmatprep.subr.bf16.mxu0 %v1561
    %2032 = vmatpush1.bf16.msra.mxu0 %v1560
    %2033 = vmatprep.subr.bf16.mxu0 %v1565
    %2034 = vmatpush1.bf16.msra.mxu0 %v1564
    %2035 = vmatprep.subr.bf16.mxu0 %v1569
    %2036 = vmatpush1.bf16.msra.mxu0 %v1568
    %2037 = vmatprep.subr.bf16.mxu0 %v1573
    %2038 = vmatpush1.bf16.msra.mxu0 %v1572
    %2039 = vmatprep.subr.bf16.mxu0 %v1577
    %2040 = vmatpush1.bf16.msra.mxu0 %v1576
    %2041 = vmatprep.subr.bf16.mxu0 %v1581
    %2042 = vmatpush1.bf16.msra.mxu0 %v1580
    %2043 = vmatprep.subr.bf16.mxu0 %v1585
    %2044 = vmatpush1.bf16.msra.mxu0 %v1584
    %2045 = vmatprep.mubr.bf16.mxu0 %v409
    %2046 = vmatmul.mubr.bf16.gmra.mrb[0].mxu0 %v408
    %v2047 = vpop.f32.mrb[0].mxu0
    %v2048 = vadd.f32 %v2007, %v2047
    %v2049 = vpop.f32.mrb[0].mxu0
    %v2050 = vadd.f32 %v2009, %v2049
    %v2051 = vpop.f32.mrb[0].mxu0
    %v2052 = vpop.f32.mrb[0].mxu0
    %2053 = vdwg.mxu0
    %2054 = vmatprep.subr.bf16.mxu0 %v1589
    %2055 = vmatpush1.bf16.msra.mxu0 %v1588
    %2056 = vmatprep.subr.bf16.mxu0 %v1593
    %2057 = vmatpush1.bf16.msra.mxu0 %v1592
    %2058 = vmatprep.subr.bf16.mxu0 %v1597
    %2059 = vmatpush1.bf16.msra.mxu0 %v1596
    %2060 = vmatprep.subr.bf16.mxu0 %v1601
    %2061 = vmatpush1.bf16.msra.mxu0 %v1600
    %2062 = vmatprep.subr.bf16.mxu0 %v1605
    %2063 = vmatpush1.bf16.msra.mxu0 %v1604
    %2064 = vmatprep.subr.bf16.mxu0 %v1609
    %2065 = vmatpush1.bf16.msra.mxu0 %v1608
    %2066 = vmatprep.subr.bf16.mxu0 %v1613
    %2067 = vmatpush1.bf16.msra.mxu0 %v1612
    %2068 = vmatprep.subr.bf16.mxu0 %v1617
    %2069 = vmatpush1.bf16.msra.mxu0 %v1616
    %2070 = vmatprep.subr.bf16.mxu0 %v1621
    %2071 = vmatpush1.bf16.msra.mxu0 %v1620
    %2072 = vmatprep.subr.bf16.mxu0 %v1625
    %2073 = vmatpush1.bf16.msra.mxu0 %v1624
    %2074 = vmatprep.subr.bf16.mxu0 %v1629
    %2075 = vmatpush1.bf16.msra.mxu0 %v1628
    %2076 = vmatprep.subr.bf16.mxu0 %v1633
    %2077 = vmatpush1.bf16.msra.mxu0 %v1632
    %2078 = vmatprep.subr.bf16.mxu0 %v1637
    %2079 = vmatpush1.bf16.msra.mxu0 %v1636
    %2080 = vmatprep.subr.bf16.mxu0 %v1641
    %2081 = vmatpush1.bf16.msra.mxu0 %v1640
    %2082 = vmatprep.subr.bf16.mxu0 %v1645
    %2083 = vmatpush1.bf16.msra.mxu0 %v1644
    %2084 = vmatprep.subr.bf16.mxu0 %v1649
    %2085 = vmatpush1.bf16.msra.mxu0 %v1648
    %2086 = vmatprep.mubr.bf16.mxu0 %v411
    %2087 = vmatmul.mubr.bf16.gmra.mrb[0].mxu0 %v410
    %v2088 = vpop.f32.mrb[0].mxu0
    %v2089 = vadd.f32 %v2048, %v2088
    %v2090 = vpop.f32.mrb[0].mxu0
    %v2091 = vadd.f32 %v2050, %v2090
    %v2092 = vpop.f32.mrb[0].mxu0
    %v2093 = vpop.f32.mrb[0].mxu0
    %2094 = vdwg.mxu0
    %2095 = vmatprep.subr.bf16.mxu0 %v1653
    %2096 = vmatpush1.bf16.msra.mxu0 %v1652
    %2097 = vmatprep.subr.bf16.mxu0 %v1657
    %2098 = vmatpush1.bf16.msra.mxu0 %v1656
    %2099 = vmatprep.subr.bf16.mxu0 %v1661
    %2100 = vmatpush1.bf16.msra.mxu0 %v1660
    %2101 = vmatprep.subr.bf16.mxu0 %v1665
    %2102 = vmatpush1.bf16.msra.mxu0 %v1664
    %2103 = vmatprep.subr.bf16.mxu0 %v1669
    %2104 = vmatpush1.bf16.msra.mxu0 %v1668
    %2105 = vmatprep.subr.bf16.mxu0 %v1673
    %2106 = vmatpush1.bf16.msra.mxu0 %v1672
    %2107 = vmatprep.subr.bf16.mxu0 %v1677
    %2108 = vmatpush1.bf16.msra.mxu0 %v1676
    %2109 = vmatprep.subr.bf16.mxu0 %v1681
    %2110 = vmatpush1.bf16.msra.mxu0 %v1680
    %2111 = vmatprep.subr.bf16.mxu0 %v1685
    %2112 = vmatpush1.bf16.msra.mxu0 %v1684
    %2113 = vmatprep.subr.bf16.mxu0 %v1689
    %2114 = vmatpush1.bf16.msra.mxu0 %v1688
    %2115 = vmatprep.subr.bf16.mxu0 %v1693
    %2116 = vmatpush1.bf16.msra.mxu0 %v1692
    %2117 = vmatprep.subr.bf16.mxu0 %v1697
    %2118 = vmatpush1.bf16.msra.mxu0 %v1696
    %2119 = vmatprep.subr.bf16.mxu0 %v1701
    %2120 = vmatpush1.bf16.msra.mxu0 %v1700
    %2121 = vmatprep.subr.bf16.mxu0 %v1705
    %2122 = vmatpush1.bf16.msra.mxu0 %v1704
    %2123 = vmatprep.subr.bf16.mxu0 %v1709
    %2124 = vmatpush1.bf16.msra.mxu0 %v1708
    %2125 = vmatprep.subr.bf16.mxu0 %v1713
    %2126 = vmatpush1.bf16.msra.mxu0 %v1712
    %2127 = vmatprep.mubr.bf16.mxu0 %v413
    %2128 = vmatmul.mubr.bf16.gmra.mrb[0].mxu0 %v412
    %v2129 = vpop.f32.mrb[0].mxu0
    %v2130 = vadd.f32 %v2089, %v2129
    %v2131 = vpop.f32.mrb[0].mxu0
    %v2132 = vadd.f32 %v2091, %v2131
    %v2133 = vpop.f32.mrb[0].mxu0
    %v2134 = vpop.f32.mrb[0].mxu0
    %2135 = vdwg.mxu0
    %2136 = vmatprep.subr.bf16.mxu0 %v1463
    %2137 = vmatpush1.bf16.msra.mxu0 %v1462
    %2138 = vmatprep.subr.bf16.mxu0 %v1467
    %2139 = vmatpush1.bf16.msra.mxu0 %v1466
    %2140 = vmatprep.subr.bf16.mxu0 %v1471
    %2141 = vmatpush1.bf16.msra.mxu0 %v1470
    %2142 = vmatprep.subr.bf16.mxu0 %v1475
    %2143 = vmatpush1.bf16.msra.mxu0 %v1474
    %2144 = vmatprep.subr.bf16.mxu0 %v1479
    %2145 = vmatpush1.bf16.msra.mxu0 %v1478
    %2146 = vmatprep.subr.bf16.mxu0 %v1483
    %2147 = vmatpush1.bf16.msra.mxu0 %v1482
    %2148 = vmatprep.subr.bf16.mxu0 %v1487
    %2149 = vmatpush1.bf16.msra.mxu0 %v1486
    %2150 = vmatprep.subr.bf16.mxu0 %v1491
    %2151 = vmatpush1.bf16.msra.mxu0 %v1490
    %2152 = vmatprep.subr.bf16.mxu0 %v1495
    %2153 = vmatpush1.bf16.msra.mxu0 %v1494
    %2154 = vmatprep.subr.bf16.mxu0 %v1499
    %2155 = vmatpush1.bf16.msra.mxu0 %v1498
    %2156 = vmatprep.subr.bf16.mxu0 %v1503
    %2157 = vmatpush1.bf16.msra.mxu0 %v1502
    %2158 = vmatprep.subr.bf16.mxu0 %v1507
    %2159 = vmatpush1.bf16.msra.mxu0 %v1506
    %2160 = vmatprep.subr.bf16.mxu0 %v1511
    %2161 = vmatpush1.bf16.msra.mxu0 %v1510
    %2162 = vmatprep.subr.bf16.mxu0 %v1515
    %2163 = vmatpush1.bf16.msra.mxu0 %v1514
    %2164 = vmatprep.subr.bf16.mxu0 %v1519
    %2165 = vmatpush1.bf16.msra.mxu0 %v1518
    %2166 = vmatprep.subr.bf16.mxu0 %v1523
    %2167 = vmatpush1.bf16.msra.mxu0 %v1522
    %2168 = vmatprep.mubr.bf16.mxu0 %v407
    %2169 = vmatmul.mubr.bf16.gmra.mrb[0].mxu0 %v406
    %v2170 = vpop.f32.mrb[0].mxu0
    %v2171 = vadd.f32 %v683, %v2170
    %v2172 = vpop.f32.mrb[0].mxu0
    %v2173 = vadd.f32 %v687, %v2172
    %v2174 = vpop.f32.mrb[0].mxu0
    %v2175 = vpop.f32.mrb[0].mxu0
    %2176 = vdwg.mxu0
    %2177 = vmatprep.subr.bf16.mxu0 %v1527
    %2178 = vmatpush1.bf16.msra.mxu0 %v1526
    %2179 = vmatprep.subr.bf16.mxu0 %v1531
    %2180 = vmatpush1.bf16.msra.mxu0 %v1530
    %2181 = vmatprep.subr.bf16.mxu0 %v1535
    %2182 = vmatpush1.bf16.msra.mxu0 %v1534
    %2183 = vmatprep.subr.bf16.mxu0 %v1539
    %2184 = vmatpush1.bf16.msra.mxu0 %v1538
    %2185 = vmatprep.subr.bf16.mxu0 %v1543
    %2186 = vmatpush1.bf16.msra.mxu0 %v1542
    %2187 = vmatprep.subr.bf16.mxu0 %v1547
    %2188 = vmatpush1.bf16.msra.mxu0 %v1546
    %2189 = vmatprep.subr.bf16.mxu0 %v1551
    %2190 = vmatpush1.bf16.msra.mxu0 %v1550
    %2191 = vmatprep.subr.bf16.mxu0 %v1555
    %2192 = vmatpush1.bf16.msra.mxu0 %v1554
    %2193 = vmatprep.subr.bf16.mxu0 %v1559
    %2194 = vmatpush1.bf16.msra.mxu0 %v1558
    %2195 = vmatprep.subr.bf16.mxu0 %v1563
    %2196 = vmatpush1.bf16.msra.mxu0 %v1562
    %2197 = vmatprep.subr.bf16.mxu0 %v1567
    %2198 = vmatpush1.bf16.msra.mxu0 %v1566
    %2199 = vmatprep.subr.bf16.mxu0 %v1571
    %2200 = vmatpush1.bf16.msra.mxu0 %v1570
    %2201 = vmatprep.subr.bf16.mxu0 %v1575
    %2202 = vmatpush1.bf16.msra.mxu0 %v1574
    %2203 = vmatprep.subr.bf16.mxu0 %v1579
    %2204 = vmatpush1.bf16.msra.mxu0 %v1578
    %2205 = vmatprep.subr.bf16.mxu0 %v1583
    %2206 = vmatpush1.bf16.msra.mxu0 %v1582
    %2207 = vmatprep.subr.bf16.mxu0 %v1587
    %2208 = vmatpush1.bf16.msra.mxu0 %v1586
    %2209 = vmatprep.mubr.bf16.mxu0 %v409
    %2210 = vmatmul.mubr.bf16.gmra.mrb[0].mxu0 %v408
    %v2211 = vpop.f32.mrb[0].mxu0
    %v2212 = vadd.f32 %v2171, %v2211
    %v2213 = vpop.f32.mrb[0].mxu0
    %v2214 = vadd.f32 %v2173, %v2213
    %v2215 = vpop.f32.mrb[0].mxu0
    %v2216 = vpop.f32.mrb[0].mxu0
    %2217 = vdwg.mxu0
    %2218 = vmatprep.subr.bf16.mxu0 %v1591
    %2219 = vmatpush1.bf16.msra.mxu0 %v1590
    %2220 = vmatprep.subr.bf16.mxu0 %v1595
    %2221 = vmatpush1.bf16.msra.mxu0 %v1594
    %2222 = vmatprep.subr.bf16.mxu0 %v1599
    %2223 = vmatpush1.bf16.msra.mxu0 %v1598
    %2224 = vmatprep.subr.bf16.mxu0 %v1603
    %2225 = vmatpush1.bf16.msra.mxu0 %v1602
    %2226 = vmatprep.subr.bf16.mxu0 %v1607
    %2227 = vmatpush1.bf16.msra.mxu0 %v1606
    %2228 = vmatprep.subr.bf16.mxu0 %v1611
    %2229 = vmatpush1.bf16.msra.mxu0 %v1610
    %2230 = vmatprep.subr.bf16.mxu0 %v1615
    %2231 = vmatpush1.bf16.msra.mxu0 %v1614
    %2232 = vmatprep.subr.bf16.mxu0 %v1619
    %2233 = vmatpush1.bf16.msra.mxu0 %v1618
    %2234 = vmatprep.subr.bf16.mxu0 %v1623
    %2235 = vmatpush1.bf16.msra.mxu0 %v1622
    %2236 = vmatprep.subr.bf16.mxu0 %v1627
    %2237 = vmatpush1.bf16.msra.mxu0 %v1626
    %2238 = vmatprep.subr.bf16.mxu0 %v1631
    %2239 = vmatpush1.bf16.msra.mxu0 %v1630
    %2240 = vmatprep.subr.bf16.mxu0 %v1635
    %2241 = vmatpush1.bf16.msra.mxu0 %v1634
    %2242 = vmatprep.subr.bf16.mxu0 %v1639
    %2243 = vmatpush1.bf16.msra.mxu0 %v1638
    %2244 = vmatprep.subr.bf16.mxu0 %v1643
    %2245 = vmatpush1.bf16.msra.mxu0 %v1642
    %2246 = vmatprep.subr.bf16.mxu0 %v1647
    %2247 = vmatpush1.bf16.msra.mxu0 %v1646
    %2248 = vmatprep.subr.bf16.mxu0 %v1651
    %2249 = vmatpush1.bf16.msra.mxu0 %v1650
    %2250 = vmatprep.mubr.bf16.mxu0 %v411
    %2251 = vmatmul.mubr.bf16.gmra.mrb[0].mxu0 %v410
    %v2252 = vpop.f32.mrb[0].mxu0
    %v2253 = vadd.f32 %v2212, %v2252
    %v2254 = vpop.f32.mrb[0].mxu0
    %v2255 = vadd.f32 %v2214, %v2254
    %v2256 = vpop.f32.mrb[0].mxu0
    %v2257 = vpop.f32.mrb[0].mxu0
    %2258 = vdwg.mxu0
    %2259 = vmatprep.subr.bf16.mxu0 %v1655
    %2260 = vmatpush1.bf16.msra.mxu0 %v1654
    %2261 = vmatprep.subr.bf16.mxu0 %v1659
    %2262 = vmatpush1.bf16.msra.mxu0 %v1658
    %2263 = vmatprep.subr.bf16.mxu0 %v1663
    %2264 = vmatpush1.bf16.msra.mxu0 %v1662
    %2265 = vmatprep.subr.bf16.mxu0 %v1667
    %2266 = vmatpush1.bf16.msra.mxu0 %v1666
    %2267 = vmatprep.subr.bf16.mxu0 %v1671
    %2268 = vmatpush1.bf16.msra.mxu0 %v1670
    %2269 = vmatprep.subr.bf16.mxu0 %v1675
    %2270 = vmatpush1.bf16.msra.mxu0 %v1674
    %2271 = vmatprep.subr.bf16.mxu0 %v1679
    %2272 = vmatpush1.bf16.msra.mxu0 %v1678
    %2273 = vmatprep.subr.bf16.mxu0 %v1683
    %2274 = vmatpush1.bf16.msra.mxu0 %v1682
    %2275 = vmatprep.subr.bf16.mxu0 %v1687
    %2276 = vmatpush1.bf16.msra.mxu0 %v1686
    %2277 = vmatprep.subr.bf16.mxu0 %v1691
    %2278 = vmatpush1.bf16.msra.mxu0 %v1690
    %2279 = vmatprep.subr.bf16.mxu0 %v1695
    %2280 = vmatpush1.bf16.msra.mxu0 %v1694
    %2281 = vmatprep.subr.bf16.mxu0 %v1699
    %2282 = vmatpush1.bf16.msra.mxu0 %v1698
    %2283 = vmatprep.subr.bf16.mxu0 %v1703
    %2284 = vmatpush1.bf16.msra.mxu0 %v1702
    %2285 = vmatprep.subr.bf16.mxu0 %v1707
    %2286 = vmatpush1.bf16.msra.mxu0 %v1706
    %2287 = vmatprep.subr.bf16.mxu0 %v1711
    %2288 = vmatpush1.bf16.msra.mxu0 %v1710
    %2289 = vmatprep.subr.bf16.mxu0 %v1715
    %2290 = vmatpush1.bf16.msra.mxu0 %v1714
    %2291 = vmatprep.mubr.bf16.mxu0 %v413
    %2292 = vmatmul.mubr.bf16.gmra.mrb[0].mxu0 %v412
    %v2293 = vpop.f32.mrb[0].mxu0
    %v2294 = vadd.f32 %v2253, %v2293
    %v2295 = vpop.f32.mrb[0].mxu0
    %v2296 = vadd.f32 %v2255, %v2295
    %v2297 = vpop.f32.mrb[0].mxu0
    %v2298 = vpop.f32.mrb[0].mxu0
    %2299 = vdwg.mxu0
    %vm2300 = vcmp.gt.f32.partialorder %v2130, 0.0
    %vm2301 = vcmp.gt.f32.partialorder %v2132, 0.0
    %vm2302 = vcmp.gt.f32.partialorder %v2294, 0.0
    %vm2303 = vcmp.gt.f32.partialorder %v2296, 0.0
    %v2304 = vmul.f32 %v2130, 0.1
    %v2305 = vmul.f32 %v2132, 0.1
    %v2306 = vmul.f32 %v2294, 0.1
    %v2307 = vmul.f32 %v2296, 0.1
    %v2308 = vsel %vm2300, %v2130, %v2304
    %v2309 = vsel %vm2301, %v2132, %v2305
    %v2310 = vsel %vm2302, %v2294, %v2306
    %v2311 = vsel %vm2303, %v2296, %v2307
    %v2312 = vpack.c.bf16 %v2308, %v2308
    %v2313 = vpack.c.bf16 %v2309, %v2309
    %v2314 = vpack.c.bf16 %v2310, %v2310
    %v2315 = vpack.c.bf16 %v2311, %v2311
    %v2316 = vld [vmem:[#allocation7] sm:$0xff]
    %v2317 = vld [vmem:[#allocation7 + $0x8] sm:$0xff]
    %v2318 = vld [vmem:[#allocation7 + $0x10] sm:$0xff]
    %v2319 = vld [vmem:[#allocation7 + $0x18] sm:$0xff]
    %v2320 = vld [vmem:[#allocation7 + $0x20] sm:$0xff]
    %v2321 = vld [vmem:[#allocation7 + $0x28] sm:$0xff]
    %v2322 = vld [vmem:[#allocation7 + $0x30] sm:$0xff]
    %v2323 = vld [vmem:[#allocation7 + $0x38] sm:$0xff]
    %v2324 = vld [vmem:[#allocation7 + $0x40] sm:$0xff]
    %v2325 = vld [vmem:[#allocation7 + $0x48] sm:$0xff]
    %v2326 = vld [vmem:[#allocation7 + $0x50] sm:$0xff]
    %v2327 = vld [vmem:[#allocation7 + $0x58] sm:$0xff]
    %v2328 = vld [vmem:[#allocation7 + $0x60] sm:$0xff]
    %v2329 = vld [vmem:[#allocation7 + $0x68] sm:$0xff]
    %v2330 = vld [vmem:[#allocation7 + $0x70] sm:$0xff]
    %v2331 = vld [vmem:[#allocation7 + $0x78] sm:$0xff]
    %v2332 = vld [vmem:[#allocation7 + $0x80] sm:$0xff]
    %v2333 = vld [vmem:[#allocation7 + $0x88] sm:$0xff]
    %v2334 = vld [vmem:[#allocation7 + $0x90] sm:$0xff]
    %v2335 = vld [vmem:[#allocation7 + $0x98] sm:$0xff]
    %v2336 = vld [vmem:[#allocation7 + $0xa0] sm:$0xff]
    %v2337 = vld [vmem:[#allocation7 + $0xa8] sm:$0xff]
    %v2338 = vld [vmem:[#allocation7 + $0xb0] sm:$0xff]
    %v2339 = vld [vmem:[#allocation7 + $0xb8] sm:$0xff]
    %v2340 = vld [vmem:[#allocation7 + $0xc0] sm:$0xff]
    %v2341 = vld [vmem:[#allocation7 + $0xc8] sm:$0xff]
    %v2342 = vld [vmem:[#allocation7 + $0xd0] sm:$0xff]
    %v2343 = vld [vmem:[#allocation7 + $0xd8] sm:$0xff]
    %v2344 = vld [vmem:[#allocation7 + $0xe0] sm:$0xff]
    %v2345 = vld [vmem:[#allocation7 + $0xe8] sm:$0xff]
    %v2346 = vld [vmem:[#allocation7 + $0xf0] sm:$0xff]
    %v2347 = vld [vmem:[#allocation7 + $0xf8] sm:$0xff]
    %v2348 = vld [vmem:[#allocation7 + $0x100] sm:$0xff]
    %v2349 = vld [vmem:[#allocation7 + $0x108] sm:$0xff]
    %v2350 = vld [vmem:[#allocation7 + $0x110] sm:$0xff]
    %v2351 = vld [vmem:[#allocation7 + $0x118] sm:$0xff]
    %v2352 = vld [vmem:[#allocation7 + $0x120] sm:$0xff]
    %v2353 = vld [vmem:[#allocation7 + $0x128] sm:$0xff]
    %v2354 = vld [vmem:[#allocation7 + $0x130] sm:$0xff]
    %v2355 = vld [vmem:[#allocation7 + $0x138] sm:$0xff]
    %v2356 = vld [vmem:[#allocation7 + $0x140] sm:$0xff]
    %v2357 = vld [vmem:[#allocation7 + $0x148] sm:$0xff]
    %v2358 = vld [vmem:[#allocation7 + $0x150] sm:$0xff]
    %v2359 = vld [vmem:[#allocation7 + $0x158] sm:$0xff]
    %v2360 = vld [vmem:[#allocation7 + $0x160] sm:$0xff]
    %v2361 = vld [vmem:[#allocation7 + $0x168] sm:$0xff]
    %v2362 = vld [vmem:[#allocation7 + $0x170] sm:$0xff]
    %v2363 = vld [vmem:[#allocation7 + $0x178] sm:$0xff]
    %v2364 = vld [vmem:[#allocation7 + $0x180] sm:$0xff]
    %v2365 = vld [vmem:[#allocation7 + $0x188] sm:$0xff]
    %v2366 = vld [vmem:[#allocation7 + $0x190] sm:$0xff]
    %v2367 = vld [vmem:[#allocation7 + $0x198] sm:$0xff]
    %v2368 = vld [vmem:[#allocation7 + $0x1a0] sm:$0xff]
    %v2369 = vld [vmem:[#allocation7 + $0x1a8] sm:$0xff]
    %v2370 = vld [vmem:[#allocation7 + $0x1b0] sm:$0xff]
    %v2371 = vld [vmem:[#allocation7 + $0x1b8] sm:$0xff]
    %v2372 = vld [vmem:[#allocation7 + $0x1c0] sm:$0xff]
    %v2373 = vld [vmem:[#allocation7 + $0x1c8] sm:$0xff]
    %v2374 = vld [vmem:[#allocation7 + $0x1d0] sm:$0xff]
    %v2375 = vld [vmem:[#allocation7 + $0x1d8] sm:$0xff]
    %v2376 = vld [vmem:[#allocation7 + $0x1e0] sm:$0xff]
    %v2377 = vld [vmem:[#allocation7 + $0x1e8] sm:$0xff]
    %v2378 = vld [vmem:[#allocation7 + $0x1f0] sm:$0xff]
    %v2379 = vld [vmem:[#allocation7 + $0x1f8] sm:$0xff]
    %v2380 = vld [vmem:[#allocation9] sm:$0x3]
    %v2382 = vlaneseq
    %v2383 = vshrl.u32 %v2382, 7
    %v2384 = vsub.s32 0, %v2383
    %v2385 = vrot.slane %v2380, %v2384
    %v2386 = vlaneseq
    %v2387 = vshrl.u32 %v2386, 7
    %v2388 = vsub.s32 1, %v2387
    %v2389 = vrot.slane %v2380, %v2388
    %v2456 = vunpack.c.l.b16 %v2316
    %v2457 = vunpack.c.h.b16 %v2316
    %v2458 = vunpack.c.l.b16 %v2317
    %v2459 = vunpack.c.h.b16 %v2317
    %v2460 = vunpack.c.l.b16 %v2318
    %v2461 = vunpack.c.h.b16 %v2318
    %v2462 = vunpack.c.l.b16 %v2319
    %v2463 = vunpack.c.h.b16 %v2319
    %v2464 = vunpack.c.l.b16 %v2320
    %v2465 = vunpack.c.h.b16 %v2320
    %v2466 = vunpack.c.l.b16 %v2321
    %v2467 = vunpack.c.h.b16 %v2321
    %v2468 = vunpack.c.l.b16 %v2322
    %v2469 = vunpack.c.h.b16 %v2322
    %v2470 = vunpack.c.l.b16 %v2323
    %v2471 = vunpack.c.h.b16 %v2323
    %v2472 = vunpack.c.l.b16 %v2324
    %v2473 = vunpack.c.h.b16 %v2324
    %v2474 = vunpack.c.l.b16 %v2325
    %v2475 = vunpack.c.h.b16 %v2325
    %v2476 = vunpack.c.l.b16 %v2326
    %v2477 = vunpack.c.h.b16 %v2326
    %v2478 = vunpack.c.l.b16 %v2327
    %v2479 = vunpack.c.h.b16 %v2327
    %v2480 = vunpack.c.l.b16 %v2328
    %v2481 = vunpack.c.h.b16 %v2328
    %v2482 = vunpack.c.l.b16 %v2329
    %v2483 = vunpack.c.h.b16 %v2329
    %v2484 = vunpack.c.l.b16 %v2330
    %v2485 = vunpack.c.h.b16 %v2330
    %v2486 = vunpack.c.l.b16 %v2331
    %v2487 = vunpack.c.h.b16 %v2331
    %v2488 = vunpack.c.l.b16 %v2332
    %v2489 = vunpack.c.h.b16 %v2332
    %v2490 = vunpack.c.l.b16 %v2333
    %v2491 = vunpack.c.h.b16 %v2333
    %v2492 = vunpack.c.l.b16 %v2334
    %v2493 = vunpack.c.h.b16 %v2334
    %v2494 = vunpack.c.l.b16 %v2335
    %v2495 = vunpack.c.h.b16 %v2335
    %v2496 = vunpack.c.l.b16 %v2336
    %v2497 = vunpack.c.h.b16 %v2336
    %v2498 = vunpack.c.l.b16 %v2337
    %v2499 = vunpack.c.h.b16 %v2337
    %v2500 = vunpack.c.l.b16 %v2338
    %v2501 = vunpack.c.h.b16 %v2338
    %v2502 = vunpack.c.l.b16 %v2339
    %v2503 = vunpack.c.h.b16 %v2339
    %v2504 = vunpack.c.l.b16 %v2340
    %v2505 = vunpack.c.h.b16 %v2340
    %v2506 = vunpack.c.l.b16 %v2341
    %v2507 = vunpack.c.h.b16 %v2341
    %v2508 = vunpack.c.l.b16 %v2342
    %v2509 = vunpack.c.h.b16 %v2342
    %v2510 = vunpack.c.l.b16 %v2343
    %v2511 = vunpack.c.h.b16 %v2343
    %v2512 = vunpack.c.l.b16 %v2344
    %v2513 = vunpack.c.h.b16 %v2344
    %v2514 = vunpack.c.l.b16 %v2345
    %v2515 = vunpack.c.h.b16 %v2345
    %v2516 = vunpack.c.l.b16 %v2346
    %v2517 = vunpack.c.h.b16 %v2346
    %v2518 = vunpack.c.l.b16 %v2347
    %v2519 = vunpack.c.h.b16 %v2347
    %v2520 = vunpack.c.l.b16 %v2348
    %v2521 = vunpack.c.h.b16 %v2348
    %v2522 = vunpack.c.l.b16 %v2349
    %v2523 = vunpack.c.h.b16 %v2349
    %v2524 = vunpack.c.l.b16 %v2350
    %v2525 = vunpack.c.h.b16 %v2350
    %v2526 = vunpack.c.l.b16 %v2351
    %v2527 = vunpack.c.h.b16 %v2351
    %v2528 = vunpack.c.l.b16 %v2352
    %v2529 = vunpack.c.h.b16 %v2352
    %v2530 = vunpack.c.l.b16 %v2353
    %v2531 = vunpack.c.h.b16 %v2353
    %v2532 = vunpack.c.l.b16 %v2354
    %v2533 = vunpack.c.h.b16 %v2354
    %v2534 = vunpack.c.l.b16 %v2355
    %v2535 = vunpack.c.h.b16 %v2355
    %v2536 = vunpack.c.l.b16 %v2356
    %v2537 = vunpack.c.h.b16 %v2356
    %v2538 = vunpack.c.l.b16 %v2357
    %v2539 = vunpack.c.h.b16 %v2357
    %v2540 = vunpack.c.l.b16 %v2358
    %v2541 = vunpack.c.h.b16 %v2358
    %v2542 = vunpack.c.l.b16 %v2359
    %v2543 = vunpack.c.h.b16 %v2359
    %v2544 = vunpack.c.l.b16 %v2360
    %v2545 = vunpack.c.h.b16 %v2360
    %v2546 = vunpack.c.l.b16 %v2361
    %v2547 = vunpack.c.h.b16 %v2361
    %v2548 = vunpack.c.l.b16 %v2362
    %v2549 = vunpack.c.h.b16 %v2362
    %v2550 = vunpack.c.l.b16 %v2363
    %v2551 = vunpack.c.h.b16 %v2363
    %v2552 = vunpack.c.l.b16 %v2364
    %v2553 = vunpack.c.h.b16 %v2364
    %v2554 = vunpack.c.l.b16 %v2365
    %v2555 = vunpack.c.h.b16 %v2365
    %v2556 = vunpack.c.l.b16 %v2366
    %v2557 = vunpack.c.h.b16 %v2366
    %v2558 = vunpack.c.l.b16 %v2367
    %v2559 = vunpack.c.h.b16 %v2367
    %v2560 = vunpack.c.l.b16 %v2368
    %v2561 = vunpack.c.h.b16 %v2368
    %v2562 = vunpack.c.l.b16 %v2369
    %v2563 = vunpack.c.h.b16 %v2369
    %v2564 = vunpack.c.l.b16 %v2370
    %v2565 = vunpack.c.h.b16 %v2370
    %v2566 = vunpack.c.l.b16 %v2371
    %v2567 = vunpack.c.h.b16 %v2371
    %v2568 = vunpack.c.l.b16 %v2372
    %v2569 = vunpack.c.h.b16 %v2372
    %v2570 = vunpack.c.l.b16 %v2373
    %v2571 = vunpack.c.h.b16 %v2373
    %v2572 = vunpack.c.l.b16 %v2374
    %v2573 = vunpack.c.h.b16 %v2374
    %v2574 = vunpack.c.l.b16 %v2375
    %v2575 = vunpack.c.h.b16 %v2375
    %v2576 = vunpack.c.l.b16 %v2376
    %v2577 = vunpack.c.h.b16 %v2376
    %v2578 = vunpack.c.l.b16 %v2377
    %v2579 = vunpack.c.h.b16 %v2377
    %v2580 = vunpack.c.l.b16 %v2378
    %v2581 = vunpack.c.h.b16 %v2378
    %v2582 = vunpack.c.l.b16 %v2379
    %v2583 = vunpack.c.h.b16 %v2379
    %v2584 = vpack.c.b16 %v2458, %v2456
    %v2585 = vpack.c.b16 %v2459, %v2457
    %v2586 = vpack.c.b16 %v2462, %v2460
    %v2587 = vpack.c.b16 %v2463, %v2461
    %v2588 = vpack.c.b16 %v2466, %v2464
    %v2589 = vpack.c.b16 %v2467, %v2465
    %v2590 = vpack.c.b16 %v2470, %v2468
    %v2591 = vpack.c.b16 %v2471, %v2469
    %v2592 = vpack.c.b16 %v2474, %v2472
    %v2593 = vpack.c.b16 %v2475, %v2473
    %v2594 = vpack.c.b16 %v2478, %v2476
    %v2595 = vpack.c.b16 %v2479, %v2477
    %v2596 = vpack.c.b16 %v2482, %v2480
    %v2597 = vpack.c.b16 %v2483, %v2481
    %v2598 = vpack.c.b16 %v2486, %v2484
    %v2599 = vpack.c.b16 %v2487, %v2485
    %v2600 = vpack.c.b16 %v2490, %v2488
    %v2601 = vpack.c.b16 %v2491, %v2489
    %v2602 = vpack.c.b16 %v2494, %v2492
    %v2603 = vpack.c.b16 %v2495, %v2493
    %v2604 = vpack.c.b16 %v2498, %v2496
    %v2605 = vpack.c.b16 %v2499, %v2497
    %v2606 = vpack.c.b16 %v2502, %v2500
    %v2607 = vpack.c.b16 %v2503, %v2501
    %v2608 = vpack.c.b16 %v2506, %v2504
    %v2609 = vpack.c.b16 %v2507, %v2505
    %v2610 = vpack.c.b16 %v2510, %v2508
    %v2611 = vpack.c.b16 %v2511, %v2509
    %v2612 = vpack.c.b16 %v2514, %v2512
    %v2613 = vpack.c.b16 %v2515, %v2513
    %v2614 = vpack.c.b16 %v2518, %v2516
    %v2615 = vpack.c.b16 %v2519, %v2517
    %v2616 = vpack.c.b16 %v2522, %v2520
    %v2617 = vpack.c.b16 %v2523, %v2521
    %v2618 = vpack.c.b16 %v2526, %v2524
    %v2619 = vpack.c.b16 %v2527, %v2525
    %v2620 = vpack.c.b16 %v2530, %v2528
    %v2621 = vpack.c.b16 %v2531, %v2529
    %v2622 = vpack.c.b16 %v2534, %v2532
    %v2623 = vpack.c.b16 %v2535, %v2533
    %v2624 = vpack.c.b16 %v2538, %v2536
    %v2625 = vpack.c.b16 %v2539, %v2537
    %v2626 = vpack.c.b16 %v2542, %v2540
    %v2627 = vpack.c.b16 %v2543, %v2541
    %v2628 = vpack.c.b16 %v2546, %v2544
    %v2629 = vpack.c.b16 %v2547, %v2545
    %v2630 = vpack.c.b16 %v2550, %v2548
    %v2631 = vpack.c.b16 %v2551, %v2549
    %v2632 = vpack.c.b16 %v2554, %v2552
    %v2633 = vpack.c.b16 %v2555, %v2553
    %v2634 = vpack.c.b16 %v2558, %v2556
    %v2635 = vpack.c.b16 %v2559, %v2557
    %v2636 = vpack.c.b16 %v2562, %v2560
    %v2637 = vpack.c.b16 %v2563, %v2561
    %v2638 = vpack.c.b16 %v2566, %v2564
    %v2639 = vpack.c.b16 %v2567, %v2565
    %v2640 = vpack.c.b16 %v2570, %v2568
    %v2641 = vpack.c.b16 %v2571, %v2569
    %v2642 = vpack.c.b16 %v2574, %v2572
    %v2643 = vpack.c.b16 %v2575, %v2573
    %v2644 = vpack.c.b16 %v2578, %v2576
    %v2645 = vpack.c.b16 %v2579, %v2577
    %v2646 = vpack.c.b16 %v2582, %v2580
    %v2647 = vpack.c.b16 %v2583, %v2581
    %2712 = vmatprep.subr.bf16.mxu0 %v2585
    %2713 = vmatpush1.bf16.msra.mxu0 %v2584
    %2714 = vmatprep.subr.bf16.mxu0 %v2587
    %2715 = vmatpush1.bf16.msra.mxu0 %v2586
    %2716 = vmatprep.subr.bf16.mxu0 %v2589
    %2717 = vmatpush1.bf16.msra.mxu0 %v2588
    %2718 = vmatprep.subr.bf16.mxu0 %v2591
    %2719 = vmatpush1.bf16.msra.mxu0 %v2590
    %2720 = vmatprep.subr.bf16.mxu0 %v2593
    %2721 = vmatpush1.bf16.msra.mxu0 %v2592
    %2722 = vmatprep.subr.bf16.mxu0 %v2595
    %2723 = vmatpush1.bf16.msra.mxu0 %v2594
    %2724 = vmatprep.subr.bf16.mxu0 %v2597
    %2725 = vmatpush1.bf16.msra.mxu0 %v2596
    %2726 = vmatprep.subr.bf16.mxu0 %v2599
    %2727 = vmatpush1.bf16.msra.mxu0 %v2598
    %2728 = vmatprep.subr.bf16.mxu0 %v2601
    %2729 = vmatpush1.bf16.msra.mxu0 %v2600
    %2730 = vmatprep.subr.bf16.mxu0 %v2603
    %2731 = vmatpush1.bf16.msra.mxu0 %v2602
    %2732 = vmatprep.subr.bf16.mxu0 %v2605
    %2733 = vmatpush1.bf16.msra.mxu0 %v2604
    %2734 = vmatprep.subr.bf16.mxu0 %v2607
    %2735 = vmatpush1.bf16.msra.mxu0 %v2606
    %2736 = vmatprep.subr.bf16.mxu0 %v2609
    %2737 = vmatpush1.bf16.msra.mxu0 %v2608
    %2738 = vmatprep.subr.bf16.mxu0 %v2611
    %2739 = vmatpush1.bf16.msra.mxu0 %v2610
    %2740 = vmatprep.subr.bf16.mxu0 %v2613
    %2741 = vmatpush1.bf16.msra.mxu0 %v2612
    %2742 = vmatprep.subr.bf16.mxu0 %v2615
    %2743 = vmatpush1.bf16.msra.mxu0 %v2614
    %2744 = vmatprep.mubr.bf16.mxu0 %v2313
    %2745 = vmatmul.mubr.bf16.gmra.mrb[0].mxu0 %v2312
    %v2746 = vpop.f32.mrb[0].mxu0
    %v2747 = vadd.f32 %v2385, %v2746
    %v2748 = vpop.f32.mrb[0].mxu0
    %v2749 = vadd.f32 %v2389, %v2748
    %v2750 = vpop.f32.mrb[0].mxu0
    %v2751 = vpop.f32.mrb[0].mxu0
    %2752 = vdwg.mxu0
    %2753 = vmatprep.subr.bf16.mxu0 %v2617
    %2754 = vmatpush1.bf16.msra.mxu0 %v2616
    %2755 = vmatprep.subr.bf16.mxu0 %v2619
    %2756 = vmatpush1.bf16.msra.mxu0 %v2618
    %2757 = vmatprep.subr.bf16.mxu0 %v2621
    %2758 = vmatpush1.bf16.msra.mxu0 %v2620
    %2759 = vmatprep.subr.bf16.mxu0 %v2623
    %2760 = vmatpush1.bf16.msra.mxu0 %v2622
    %2761 = vmatprep.subr.bf16.mxu0 %v2625
    %2762 = vmatpush1.bf16.msra.mxu0 %v2624
    %2763 = vmatprep.subr.bf16.mxu0 %v2627
    %2764 = vmatpush1.bf16.msra.mxu0 %v2626
    %2765 = vmatprep.subr.bf16.mxu0 %v2629
    %2766 = vmatpush1.bf16.msra.mxu0 %v2628
    %2767 = vmatprep.subr.bf16.mxu0 %v2631
    %2768 = vmatpush1.bf16.msra.mxu0 %v2630
    %2769 = vmatprep.subr.bf16.mxu0 %v2633
    %2770 = vmatpush1.bf16.msra.mxu0 %v2632
    %2771 = vmatprep.subr.bf16.mxu0 %v2635
    %2772 = vmatpush1.bf16.msra.mxu0 %v2634
    %2773 = vmatprep.subr.bf16.mxu0 %v2637
    %2774 = vmatpush1.bf16.msra.mxu0 %v2636
    %2775 = vmatprep.subr.bf16.mxu0 %v2639
    %2776 = vmatpush1.bf16.msra.mxu0 %v2638
    %2777 = vmatprep.subr.bf16.mxu0 %v2641
    %2778 = vmatpush1.bf16.msra.mxu0 %v2640
    %2779 = vmatprep.subr.bf16.mxu0 %v2643
    %2780 = vmatpush1.bf16.msra.mxu0 %v2642
    %2781 = vmatprep.subr.bf16.mxu0 %v2645
    %2782 = vmatpush1.bf16.msra.mxu0 %v2644
    %2783 = vmatprep.subr.bf16.mxu0 %v2647
    %2784 = vmatpush1.bf16.msra.mxu0 %v2646
    %2785 = vmatprep.mubr.bf16.mxu0 %v2315
    %2786 = vmatmul.mubr.bf16.gmra.mrb[0].mxu0 %v2314
    %v2787 = vpop.f32.mrb[0].mxu0
    %v2788 = vadd.f32 %v2747, %v2787
    %v2789 = vpop.f32.mrb[0].mxu0
    %v2790 = vadd.f32 %v2749, %v2789
    %v2791 = vpop.f32.mrb[0].mxu0
    %v2792 = vpop.f32.mrb[0].mxu0
    %2793 = vdwg.mxu0
    %vm2794 = vcmp.gt.f32.partialorder %v2788, 0.0
    %vm2795 = vcmp.gt.f32.partialorder %v2790, 0.0
    %v2796 = vmul.f32 %v2788, 0.1
    %v2797 = vmul.f32 %v2790, 0.1
    %v2798 = vsel %vm2794, %v2788, %v2796
    %v2799 = vsel %vm2795, %v2790, %v2797
    %v2800 = vpack.c.bf16 %v2798, %v2798
    %v2801 = vpack.c.bf16 %v2799, %v2799
    %v2802 = vld [vmem:[%s7] sm:$0xf]
    %v2803 = vld [vmem:[%s7 + $0x4] sm:$0xf]
    %v2804 = vld [vmem:[%s7 + $0x8] sm:$0xf]
    %v2805 = vld [vmem:[%s7 + $0xc] sm:$0xf]
    %v2806 = vld [vmem:[%s7 + $0x10] sm:$0xf]
    %v2807 = vld [vmem:[%s7 + $0x14] sm:$0xf]
    %v2808 = vld [vmem:[%s7 + $0x18] sm:$0xf]
    %v2809 = vld [vmem:[%s7 + $0x1c] sm:$0xf]
    %v2810 = vld [vmem:[%s7 + $0x20] sm:$0xf]
    %v2811 = vld [vmem:[%s7 + $0x24] sm:$0xf]
    %v2812 = vld [vmem:[%s7 + $0x28] sm:$0xf]
    %v2813 = vld [vmem:[%s7 + $0x2c] sm:$0xf]
    %v2814 = vld [vmem:[%s7 + $0x30] sm:$0xf]
    %v2815 = vld [vmem:[%s7 + $0x34] sm:$0xf]
    %v2816 = vld [vmem:[%s7 + $0x38] sm:$0xf]
    %v2817 = vld [vmem:[%s7 + $0x3c] sm:$0xf]
    %v2818 = vld [vmem:[%s7 + $0x40] sm:$0xf]
    %v2819 = vld [vmem:[%s7 + $0x44] sm:$0xf]
    %v2820 = vld [vmem:[%s7 + $0x48] sm:$0xf]
    %v2821 = vld [vmem:[%s7 + $0x4c] sm:$0xf]
    %v2822 = vld [vmem:[%s7 + $0x50] sm:$0xf]
    %v2823 = vld [vmem:[%s7 + $0x54] sm:$0xf]
    %v2824 = vld [vmem:[%s7 + $0x58] sm:$0xf]
    %v2825 = vld [vmem:[%s7 + $0x5c] sm:$0xf]
    %v2826 = vld [vmem:[%s7 + $0x60] sm:$0xf]
    %v2827 = vld [vmem:[%s7 + $0x64] sm:$0xf]
    %v2828 = vld [vmem:[%s7 + $0x68] sm:$0xf]
    %v2829 = vld [vmem:[%s7 + $0x6c] sm:$0xf]
    %v2830 = vld [vmem:[%s7 + $0x70] sm:$0xf]
    %v2831 = vld [vmem:[%s7 + $0x74] sm:$0xf]
    %v2832 = vld [vmem:[%s7 + $0x78] sm:$0xf]
    %v2833 = vld [vmem:[%s7 + $0x7c] sm:$0xf]
    %v2834 = vld [vmem:[%s8] sm:$0x1]
    %v2836 = vlaneseq
    %v2837 = vshrl.u32 %v2836, 7
    %v2838 = vsub.s32 0, %v2837
    %v2839 = vrot.slane %v2834, %v2838
    %v2873 = vunpack.c.l.b16 %v2802
    %v2874 = vunpack.c.l.b16 %v2803
    %v2875 = vunpack.c.l.b16 %v2804
    %v2876 = vunpack.c.l.b16 %v2805
    %v2877 = vunpack.c.l.b16 %v2806
    %v2878 = vunpack.c.l.b16 %v2807
    %v2879 = vunpack.c.l.b16 %v2808
    %v2880 = vunpack.c.l.b16 %v2809
    %v2881 = vunpack.c.l.b16 %v2810
    %v2882 = vunpack.c.l.b16 %v2811
    %v2883 = vunpack.c.l.b16 %v2812
    %v2884 = vunpack.c.l.b16 %v2813
    %v2885 = vunpack.c.l.b16 %v2814
    %v2886 = vunpack.c.l.b16 %v2815
    %v2887 = vunpack.c.l.b16 %v2816
    %v2888 = vunpack.c.l.b16 %v2817
    %v2889 = vunpack.c.l.b16 %v2818
    %v2890 = vunpack.c.l.b16 %v2819
    %v2891 = vunpack.c.l.b16 %v2820
    %v2892 = vunpack.c.l.b16 %v2821
    %v2893 = vunpack.c.l.b16 %v2822
    %v2894 = vunpack.c.l.b16 %v2823
    %v2895 = vunpack.c.l.b16 %v2824
    %v2896 = vunpack.c.l.b16 %v2825
    %v2897 = vunpack.c.l.b16 %v2826
    %v2898 = vunpack.c.l.b16 %v2827
    %v2899 = vunpack.c.l.b16 %v2828
    %v2900 = vunpack.c.l.b16 %v2829
    %v2901 = vunpack.c.l.b16 %v2830
    %v2902 = vunpack.c.l.b16 %v2831
    %v2903 = vunpack.c.l.b16 %v2832
    %v2904 = vunpack.c.l.b16 %v2833
    %v2905 = vpack.c.b16 %v2874, %v2873
    %v2906 = vpack.c.b16 %v2876, %v2875
    %v2907 = vpack.c.b16 %v2878, %v2877
    %v2908 = vpack.c.b16 %v2880, %v2879
    %v2909 = vpack.c.b16 %v2882, %v2881
    %v2910 = vpack.c.b16 %v2884, %v2883
    %v2911 = vpack.c.b16 %v2886, %v2885
    %v2912 = vpack.c.b16 %v2888, %v2887
    %v2913 = vpack.c.b16 %v2890, %v2889
    %v2914 = vpack.c.b16 %v2892, %v2891
    %v2915 = vpack.c.b16 %v2894, %v2893
    %v2916 = vpack.c.b16 %v2896, %v2895
    %v2917 = vpack.c.b16 %v2898, %v2897
    %v2918 = vpack.c.b16 %v2900, %v2899
    %v2919 = vpack.c.b16 %v2902, %v2901
    %v2920 = vpack.c.b16 %v2904, %v2903
    %2937 = vmatprep.subr.bf16.mxu0 0
    %2938 = vmatpush1.bf16.msra.mxu0 %v2905
    %2939 = vmatprep.subr.bf16.mxu0 0
    %2940 = vmatpush1.bf16.msra.mxu0 %v2906
    %2941 = vmatprep.subr.bf16.mxu0 0
    %2942 = vmatpush1.bf16.msra.mxu0 %v2907
    %2943 = vmatprep.subr.bf16.mxu0 0
    %2944 = vmatpush1.bf16.msra.mxu0 %v2908
    %2945 = vmatprep.subr.bf16.mxu0 0
    %2946 = vmatpush1.bf16.msra.mxu0 %v2909
    %2947 = vmatprep.subr.bf16.mxu0 0
    %2948 = vmatpush1.bf16.msra.mxu0 %v2910
    %2949 = vmatprep.subr.bf16.mxu0 0
    %2950 = vmatpush1.bf16.msra.mxu0 %v2911
    %2951 = vmatprep.subr.bf16.mxu0 0
    %2952 = vmatpush1.bf16.msra.mxu0 %v2912
    %2953 = vmatprep.subr.bf16.mxu0 0
    %2954 = vmatpush1.bf16.msra.mxu0 %v2913
    %2955 = vmatprep.subr.bf16.mxu0 0
    %2956 = vmatpush1.bf16.msra.mxu0 %v2914
    %2957 = vmatprep.subr.bf16.mxu0 0
    %2958 = vmatpush1.bf16.msra.mxu0 %v2915
    %2959 = vmatprep.subr.bf16.mxu0 0
    %2960 = vmatpush1.bf16.msra.mxu0 %v2916
    %2961 = vmatprep.subr.bf16.mxu0 0
    %2962 = vmatpush1.bf16.msra.mxu0 %v2917
    %2963 = vmatprep.subr.bf16.mxu0 0
    %2964 = vmatpush1.bf16.msra.mxu0 %v2918
    %2965 = vmatprep.subr.bf16.mxu0 0
    %2966 = vmatpush1.bf16.msra.mxu0 %v2919
    %2967 = vmatprep.subr.bf16.mxu0 0
    %2968 = vmatpush1.bf16.msra.mxu0 %v2920
    %2969 = vmatprep.mubr.bf16.mxu0 %v2801
    %2970 = vmatmul.mubr.bf16.gmra.mrb[0].mxu0 %v2800
    %v2971 = vpop.f32.mrb[0].mxu0
    %v2972 = vadd.f32 %v2839, %v2971
    %v2973 = vpop.f32.mrb[0].mxu0
    %v2974 = vpop.f32.mrb[0].mxu0
    %v2975 = vpop.f32.mrb[0].mxu0
    %2976 = vdwg.mxu0
    %vm2977 = vcmp.gt.f32.partialorder %v2972, 0.0
    %v2978 = vmul.f32 %v2972, 0.1
    %v2979 = vsel %vm2977, %v2972, %v2978
    %v2980 = vpack.c.bf16 %v2979, %v2979
    %v2981 = vld [vmem:[%s9] sm:$0xf]
    %v2982 = vld [vmem:[%s9 + $0x4] sm:$0xf]
    %v2983 = vld [vmem:[%s9 + $0x8] sm:$0xf]
    %v2984 = vld [vmem:[%s9 + $0xc] sm:$0xf]
    %v2985 = vld [vmem:[%s9 + $0x10] sm:$0xf]
    %v2986 = vld [vmem:[%s9 + $0x14] sm:$0xf]
    %v2987 = vld [vmem:[%s9 + $0x18] sm:$0xf]
    %v2988 = vld [vmem:[%s9 + $0x1c] sm:$0xf]
    %v2989 = vld [vmem:[%s9 + $0x20] sm:$0xf]
    %v2990 = vld [vmem:[%s9 + $0x24] sm:$0xf]
    %v2991 = vld [vmem:[%s9 + $0x28] sm:$0xf]
    %v2992 = vld [vmem:[%s9 + $0x2c] sm:$0xf]
    %v2993 = vld [vmem:[%s9 + $0x30] sm:$0xf]
    %v2994 = vld [vmem:[%s9 + $0x34] sm:$0xf]
    %v2995 = vld [vmem:[%s9 + $0x38] sm:$0xf]
    %v2996 = vld [vmem:[%s9 + $0x3c] sm:$0xf]
    %v2997 = vld [vmem:[%s10] sm:$0x1]
    %v2999 = vlaneseq
    %v3000 = vshrl.u32 %v2999, 7
    %v3001 = vsub.s32 0, %v3000
    %v3002 = vrot.slane %v2997, %v3001
    %v3020 = vunpack.c.l.b16 %v2981
    %v3021 = vunpack.c.l.b16 %v2982
    %v3022 = vunpack.c.l.b16 %v2983
    %v3023 = vunpack.c.l.b16 %v2984
    %v3024 = vunpack.c.l.b16 %v2985
    %v3025 = vunpack.c.l.b16 %v2986
    %v3026 = vunpack.c.l.b16 %v2987
    %v3027 = vunpack.c.l.b16 %v2988
    %v3028 = vunpack.c.l.b16 %v2989
    %v3029 = vunpack.c.l.b16 %v2990
    %v3030 = vunpack.c.l.b16 %v2991
    %v3031 = vunpack.c.l.b16 %v2992
    %v3032 = vunpack.c.l.b16 %v2993
    %v3033 = vunpack.c.l.b16 %v2994
    %v3034 = vunpack.c.l.b16 %v2995
    %v3035 = vunpack.c.l.b16 %v2996
    %v3036 = vpack.c.b16 %v3021, %v3020
    %v3037 = vpack.c.b16 %v3023, %v3022
    %v3038 = vpack.c.b16 %v3025, %v3024
    %v3039 = vpack.c.b16 %v3027, %v3026
    %v3040 = vpack.c.b16 %v3029, %v3028
    %v3041 = vpack.c.b16 %v3031, %v3030
    %v3042 = vpack.c.b16 %v3033, %v3032
    %v3043 = vpack.c.b16 %v3035, %v3034
    %3052 = vmatprep.subr.bf16.mxu0 0
    %3053 = vmatpush1.bf16.msra.mxu0 %v3036
    %3054 = vmatprep.subr.bf16.mxu0 0
    %3055 = vmatpush1.bf16.msra.mxu0 %v3037
    %3056 = vmatprep.subr.bf16.mxu0 0
    %3057 = vmatpush1.bf16.msra.mxu0 %v3038
    %3058 = vmatprep.subr.bf16.mxu0 0
    %3059 = vmatpush1.bf16.msra.mxu0 %v3039
    %3060 = vmatprep.subr.bf16.mxu0 0
    %3061 = vmatpush1.bf16.msra.mxu0 %v3040
    %3062 = vmatprep.subr.bf16.mxu0 0
    %3063 = vmatpush1.bf16.msra.mxu0 %v3041
    %3064 = vmatprep.subr.bf16.mxu0 0
    %3065 = vmatpush1.bf16.msra.mxu0 %v3042
    %3066 = vmatprep.subr.bf16.mxu0 0
    %3067 = vmatpush1.bf16.msra.mxu0 %v3043
    %3068 = vmatprep.subr.bf16.mxu0 0
    %3069 = vmatpush1.bf16.msra.mxu0 0
    %3070 = vmatprep.subr.bf16.mxu0 0
    %3071 = vmatpush1.bf16.msra.mxu0 0
    %3072 = vmatprep.subr.bf16.mxu0 0
    %3073 = vmatpush1.bf16.msra.mxu0 0
    %3074 = vmatprep.subr.bf16.mxu0 0
    %3075 = vmatpush1.bf16.msra.mxu0 0
    %3076 = vmatprep.subr.bf16.mxu0 0
    %3077 = vmatpush1.bf16.msra.mxu0 0
    %3078 = vmatprep.subr.bf16.mxu0 0
    %3079 = vmatpush1.bf16.msra.mxu0 0
    %3080 = vmatprep.subr.bf16.mxu0 0
    %3081 = vmatpush1.bf16.msra.mxu0 0
    %3082 = vmatprep.subr.bf16.mxu0 0
    %3083 = vmatpush1.bf16.msra.mxu0 0
    %3084 = vmatprep.mubr.bf16.mxu0 0
    %3085 = vmatmul.mubr.bf16.gmra.mrb[0].mxu0 %v2980
    %v3086 = vpop.f32.mrb[0].mxu0
    %v3087 = vadd.f32 %v3002, %v3086
    %v3088 = vpop.f32.mrb[0].mxu0
    %v3089 = vpop.f32.mrb[0].mxu0
    %v3090 = vpop.f32.mrb[0].mxu0
    %3091 = vdwg.mxu0
    %vm3092 = vcmp.gt.f32.partialorder %v3087, 0.0
    %v3093 = vmul.f32 %v3087, 0.1
    %v3094 = vsel %vm3092, %v3087, %v3093
    %v3095 = vpack.c.bf16 %v3094, %v3094
    %v3096 = vld [vmem:[#allocation10] sm:$0xf]
    %v3097 = vld [vmem:[#allocation10 + $0x4] sm:$0xf]
    %v3098 = vld [vmem:[#allocation10 + $0x8] sm:$0xf]
    %v3099 = vld [vmem:[#allocation10 + $0xc] sm:$0xf]
    %v3100 = vld [vmem:[#allocation10 + $0x10] sm:$0xf]
    %v3101 = vld [vmem:[#allocation10 + $0x14] sm:$0xf]
    %v3102 = vld [vmem:[#allocation10 + $0x18] sm:$0xf]
    %v3103 = vld [vmem:[#allocation10 + $0x1c] sm:$0xf]
    %v3104 = vld [vmem:[%s12] sm:$0x1]
    %v3106 = vlaneseq
    %v3107 = vshrl.u32 %v3106, 7
    %v3108 = vsub.s32 0, %v3107
    %v3109 = vrot.slane %v3104, %v3108
    %v3119 = vunpack.c.l.b16 %v3096
    %v3120 = vunpack.c.l.b16 %v3097
    %v3121 = vunpack.c.l.b16 %v3098
    %v3122 = vunpack.c.l.b16 %v3099
    %v3123 = vunpack.c.l.b16 %v3100
    %v3124 = vunpack.c.l.b16 %v3101
    %v3125 = vunpack.c.l.b16 %v3102
    %v3126 = vunpack.c.l.b16 %v3103
    %v3127 = vpack.c.b16 %v3120, %v3119
    %v3128 = vpack.c.b16 %v3122, %v3121
    %v3129 = vpack.c.b16 %v3124, %v3123
    %v3130 = vpack.c.b16 %v3126, %v3125
    %vm3135 = vcmask 523264
    %v3137 = vsel %vm3135, %v3095, 0
    %3139 = vmatprep.subr.bf16.mxu0 0
    %3140 = vmatpush1.bf16.msra.mxu0 %v3127
    %3141 = vmatprep.subr.bf16.mxu0 0
    %3142 = vmatpush1.bf16.msra.mxu0 %v3128
    %3143 = vmatprep.subr.bf16.mxu0 0
    %3144 = vmatpush1.bf16.msra.mxu0 %v3129
    %3145 = vmatprep.subr.bf16.mxu0 0
    %3146 = vmatpush1.bf16.msra.mxu0 %v3130
    %3147 = vmatprep.subr.bf16.mxu0 0
    %3148 = vmatpush1.bf16.msra.mxu0 0
    %3149 = vmatprep.subr.bf16.mxu0 0
    %3150 = vmatpush1.bf16.msra.mxu0 0
    %3151 = vmatprep.subr.bf16.mxu0 0
    %3152 = vmatpush1.bf16.msra.mxu0 0
    %3153 = vmatprep.subr.bf16.mxu0 0
    %3154 = vmatpush1.bf16.msra.mxu0 0
    %3155 = vmatprep.subr.bf16.mxu0 0
    %3156 = vmatpush1.bf16.msra.mxu0 0
    %3157 = vmatprep.subr.bf16.mxu0 0
    %3158 = vmatpush1.bf16.msra.mxu0 0
    %3159 = vmatprep.subr.bf16.mxu0 0
    %3160 = vmatpush1.bf16.msra.mxu0 0
    %3161 = vmatprep.subr.bf16.mxu0 0
    %3162 = vmatpush1.bf16.msra.mxu0 0
    %3163 = vmatprep.subr.bf16.mxu0 0
    %3164 = vmatpush1.bf16.msra.mxu0 0
    %3165 = vmatprep.subr.bf16.mxu0 0
    %3166 = vmatpush1.bf16.msra.mxu0 0
    %3167 = vmatprep.subr.bf16.mxu0 0
    %3168 = vmatpush1.bf16.msra.mxu0 0
    %3169 = vmatprep.subr.bf16.mxu0 0
    %3170 = vmatpush1.bf16.msra.mxu0 0
    %3171 = vmatprep.mubr.bf16.mxu0 0
    %3172 = vmatmul.mubr.bf16.gmra.mrb[0].mxu0 %v3137
    %v3173 = vpop.f32.mrb[0].mxu0
    %v3174 = vadd.f32 %v3109, %v3173
    %v3175 = vpop.f32.mrb[0].mxu0
    %v3176 = vpop.f32.mrb[0].mxu0
    %v3177 = vpop.f32.mrb[0].mxu0
    %3178 = vdwg.mxu0
    %3179 = vst [vmem:[%s13] sm:$0xff] %v3174
    // Predicated region
    $region78: #{wrench_encoder_forward.1} parent=1 // pred_check
      _
    $region79: #{wrench_encoder_forward.1} parent=1 // pred_check_branch
      %3181 = sbr.rel (0) target = $region81
    $region80: #{wrench_encoder_forward.1} parent=1 // pred_region
      _
    $region81: #{wrench_encoder_forward.1} parent=1 // pred_fallthru
      _
    // Predicated region
    $region82: #{wrench_encoder_forward.1} parent=1 // pred_check
      _
    $region83: #{wrench_encoder_forward.1} parent=1 // pred_check_branch
      %3183 = sbr.rel (0) target = $region85
    $region84: #{wrench_encoder_forward.1} parent=1 // pred_region
      _
    $region85: #{wrench_encoder_forward.1} parent=1 // pred_fallthru
      _
    %3184 = vsyncpa [#allocation3], 1
    %3185 = vsyncpa [#allocation5], 1
    %3186 = vsyncpa [#allocation8], 1
    %3187 = vsyncpa [#allocation11], 1

</llo_original>
